<compile_context>
chip_gen: v5e
topology: v5e:2x2
jax: 0.10.0
libtpu: 0.0.40
codegen_flags: <defaults>
</compile_context>

<pallas_src>
import functools

import jax
import jax.numpy as jnp
from jax import lax
from jax.experimental import pallas as pl
from jax.experimental.pallas import tpu as pltpu

_LANE = 128          # pad channel-like minor dims to full lanes
_TIME_ALIGN = 16     # bf16 sublane packing granule (also a multiple of 8 for f32)
_NEG_BIG = -1e30     # effectively -inf bias for padded class lanes (must stay f32)
_HIDDEN = 1024       # fixed by the PyTorch module (linear1 -> 1024)


def _round_up(v, m):
    return (v + m - 1) // m * m


def _vmem_estimate(bt, lt, mc, kp, h, ncp):
    """Rough per-grid-step VMEM bytes (lane padding of the mc minor dim included)."""
    x_blk = bt * lt * _LANE * 2                      # bf16 im2col tile (mc -> 128 lanes)
    out_blk = bt * ncp * 4
    w_bytes = (mc * kp + kp * h + h * ncp) * 2 + (kp + h + ncp) * 4
    interm = 2 * bt * lt * kp * 4                    # f32 conv acc + masked relu temps
    scratch = bt * kp * 4                            # pooled-sum accumulator
    return 2 * (x_blk + out_blk + w_bytes) + interm + scratch


def keyword_cnn_kernel(x_ref, wc_ref, bc_ref, w1_ref, b1_ref, w2_ref, b2_ref,
                       out_ref, pool_ref, *, l_out):
    """Grid = (batch tiles ["parallel"], time tiles ["arbitrary"]).

    x_ref  : (bt, lt, m*C)  bf16  im2col slab for this (batch, time) tile
    wc_ref : (m*C, Kp)      bf16  conv taps flattened tap-major / channel-minor
    bc_ref : (1, Kp)        f32
    w1_ref : (Kp, H)        bf16  zero rows for padded kernels
    b1_ref : (1, H)         f32
    w2_ref : (H, NCp)       bf16  zero columns for padded classes
    b2_ref : (1, NCp)       f32   padded class lanes hold -1e30
    out_ref: (bt, NCp)      f32   log-softmax (written at the last time step)
    pool_ref:(bt, Kp)       f32   VMEM scratch: running sum over time
    """
    bt, lt, mc = x_ref.shape
    kp = wc_ref.shape[1]
    t = pl.program_id(1)
    nt = pl.num_programs(1)

    @pl.when(t == 0)
    def _():
        pool_ref[...] = jnp.zeros_like(pool_ref)

    # ---- Conv1d(padding=m-1) + bias + ReLU: one im2col matmul per time tile ----
    x2d = x_ref[...].reshape(bt * lt, mc)                    # layout-clean merge
    y = jnp.dot(x2d, wc_ref[...], preferred_element_type=jnp.float32)
    h = jnp.maximum(y.reshape(bt, lt, kp) + bc_ref[...], 0.0)

    # Mask halo/alignment rows (global time index >= l_out), accumulate the sum.
    t_idx = t * lt + lax.broadcasted_iota(jnp.int32, (1, lt, 1), 1)
    h = jnp.where(t_idx < l_out, h, 0.0)
    pool_ref[...] += jnp.sum(h, axis=1)                      # (bt, Kp)

    # ---- Finalize once per batch tile: mean, linear1+ReLU, linear_out, lsm -----
    @pl.when(t == nt - 1)
    def _():
        # Temporal mean; 1/l_out stays a single (bt, Kp) VPU multiply rather than
        # being folded into w1 so prepared params don't depend on sequence length.
        pooled = pool_ref[...] * (1.0 / l_out)

        h1 = jnp.dot(pooled.astype(w1_ref.dtype), w1_ref[...],
                     preferred_element_type=jnp.float32) + b1_ref[...]
        h1 = jnp.maximum(h1, 0.0)                            # (bt, H) f32

        logits = jnp.dot(h1.astype(w2_ref.dtype), w2_ref[...],
                         preferred_element_type=jnp.float32) + b2_ref[...]

        # log_softmax over classes; padded lanes contribute exp(-1e30) == 0.
        mx = jnp.max(logits, axis=1, keepdims=True)
        sh = logits - mx
        lse = jnp.log(jnp.sum(jnp.exp(sh), axis=1, keepdims=True))
        out_ref[...] = sh - lse


def init_params(key, num_classes, num_features, num_kernels, mem_depth,
                hidden=_HIDDEN):
    """PyTorch-default-style (uniform +/- 1/sqrt(fan_in)) init, logical shapes.

    wc[j, c, k] corresponds to PyTorch Conv1d weight[k, c, j]; w1 / w2 are the
    transposed PyTorch Linear weights.
    """
    ks = jax.random.split(key, 6)

    def unif(k, shape, fan_in):
        bound = 1.0 / (fan_in ** 0.5)
        return jax.random.uniform(k, shape, jnp.float32, -bound, bound)

    fan_conv = num_features * mem_depth
    wc = unif(ks[0], (mem_depth, num_features, num_kernels), fan_conv)
    bc = unif(ks[1], (1, num_kernels), fan_conv)
    w1 = unif(ks[2], (num_kernels, hidden), num_kernels)
    b1 = unif(ks[3], (1, hidden), num_kernels)
    w2 = unif(ks[4], (hidden, num_classes), hidden)
    b2 = unif(ks[5], (1, num_classes), hidden)
    return (wc, bc, w1, b1, w2, b2)


def prepare_params(params, compute_dtype=jnp.bfloat16):
    """Pad kernel/class dims to 128 lanes, flatten conv taps for im2col, cast to bf16.

    Zero-padded kernels / weight rows are exact no-ops; padded class lanes get a
    -1e30 bias (kept in f32 -- it would overflow bf16) so log_softmax ignores them.
    """
    wc, bc, w1, b1, w2, b2 = params
    m, c, k = wc.shape
    h, nc = w2.shape
    kp = _round_up(k, _LANE)
    ncp = _round_up(nc, _LANE)

    # (m, C, K) -> (m*C, Kp), row order = tap j major, channel c minor.
    wcol = jnp.pad(wc, ((0, 0), (0, 0), (0, kp - k))).reshape(m * c, kp)
    wcol = wcol.astype(compute_dtype)
    bc_p = jnp.pad(bc, ((0, 0), (0, kp - k))).astype(jnp.float32)
    w1_p = jnp.pad(w1, ((0, kp - k), (0, 0))).astype(compute_dtype)
    b1_p = b1.astype(jnp.float32)
    w2_p = jnp.pad(w2, ((0, 0), (0, ncp - nc))).astype(compute_dtype)
    b2_p = jnp.pad(b2, ((0, 0), (0, ncp - nc)),
                   constant_values=_NEG_BIG).astype(jnp.float32)
    return (wcol, bc_p, w1_p, b1_p, w2_p, b2_p)


def keyword_cnn_forward(x, prepared_params, mem_depth, num_classes,
                        batch_tile=128, time_tile=512,
                        compute_dtype=jnp.bfloat16,
                        vmem_budget_bytes=48 * 1024 * 1024):
    """Matches KeyWordCNN1d(task_str='a').forward semantics."""
    if x.ndim != 3:
        x = jnp.squeeze(x, axis=1)             # (B,1,C,L) -> (B,C,L); never drop batch
    B, C, L = x.shape
    signal_length = L

    wcol, bc, w1, b1, w2, b2 = prepared_params
    MC, Kp = wcol.shape
    m = mem_depth
    assert MC == m * C, "prepared conv weight does not match input channels"
    H = w1.shape[1]
    NCp = w2.shape[1]

    pad = m - 1
    L_out = L + pad                             # Conv1d(padding=m-1) output length

    # ---- tile selection --------------------------------------------------------
    lt = min(_round_up(time_tile, _TIME_ALIGN), _round_up(L_out, _TIME_ALIGN))
    bt = min(batch_tile, _round_up(B, 8))
    if B > 8 and _round_up(B, bt) == bt:
        # Keep >= 2 batch grid steps so v7x's second TensorCore has work.
        bt = max(8, _round_up(-(-B // 2), 8))
    # Shrink tiles until the per-step VMEM estimate fits (v7x has 64 MiB/TC).
    while (_vmem_estimate(bt, lt, MC, Kp, H, NCp) > vmem_budget_bytes
           and (bt > 8 or lt > _TIME_ALIGN)):
        if bt > 8:
            bt = max(8, _round_up(bt // 2, 8))
        else:
            lt = max(_TIME_ALIGN, _round_up(lt // 2, _TIME_ALIGN))

    Bp = _round_up(B, bt)
    Lt = _round_up(L_out, lt)
    n_t = Lt // lt

    # ---- wrapper glue (small fused XLA ops next to the 1024-wide weights) ------
    # NCL -> NLC, conv halo pad, im2col to (Bp, Lt, m*C), batch/time zero pad, bf16.
    xt = jnp.transpose(x, (0, 2, 1))                               # (B, L, C)
    xp = jnp.pad(xt, ((0, Bp - B), (pad, pad), (0, 0)))            # (Bp, L+2p, C)
    cols = jnp.concatenate([xp[:, j:j + L_out, :] for j in range(m)], axis=2)
    x_im2col = jnp.pad(cols, ((0, 0), (0, Lt - L_out), (0, 0))).astype(compute_dtype)

    flops = int(2 * Bp * L_out * MC * Kp + 2 * Bp * Kp * H + 2 * Bp * H * NCp)
    bytes_accessed = int(sum(int(a.size) * a.dtype.itemsize
                             for a in (x_im2col, wcol, bc, w1, b1, w2, b2))
                         + Bp * NCp * 4)
    vmem_limit = int(min(max(_vmem_estimate(bt, lt, MC, Kp, H, NCp) * 1.25,
                             32 * 1024 * 1024), 64 * 1024 * 1024))

    out_padded = pl.pallas_call(
        functools.partial(keyword_cnn_kernel, l_out=L_out),
        out_shape=jax.ShapeDtypeStruct((Bp, NCp), jnp.float32),
        grid=(Bp // bt, n_t),
        in_specs=[
            pl.BlockSpec((bt, lt, MC), lambda i, t: (i, t, 0)),    # stream im2col tiles
            pl.BlockSpec((MC, Kp), lambda i, t: (0, 0)),           # weights stay resident
            pl.BlockSpec((1, Kp), lambda i, t: (0, 0)),
            pl.BlockSpec((Kp, H), lambda i, t: (0, 0)),
            pl.BlockSpec((1, H), lambda i, t: (0, 0)),
            pl.BlockSpec((H, NCp), lambda i, t: (0, 0)),
            pl.BlockSpec((1, NCp), lambda i, t: (0, 0)),
        ],
        out_specs=pl.BlockSpec((bt, NCp), lambda i, t: (i, 0)),    # lane-dense output
        scratch_shapes=[pltpu.VMEM((bt, Kp), jnp.float32)],        # pooled-sum accumulator
        compiler_params=pltpu.CompilerParams(
            dimension_semantics=("parallel", "arbitrary"),
            vmem_limit_bytes=vmem_limit,
        ),
        cost_estimate=pl.CostEstimate(flops=flops,
                                      transcendentals=int(Bp * NCp + Bp),
                                      bytes_accessed=bytes_accessed),
    )(x_im2col, wcol, bc, w1, b1, w2, b2)

    # PyTorch: output.view(B, -1)[:, :signal_length] (clamped slice; if
    # signal_length < num_classes this returns truncated log-probabilities,
    # faithfully mirroring the reference module).
    return out_padded[:B, :min(num_classes, signal_length)]


def reference_forward(x, raw_params, mem_depth, num_classes):
    """Pure-JAX f32 reference of KeyWordCNN1d(task_str='a').forward."""
    wc, bc, w1, b1, w2, b2 = raw_params
    if x.ndim != 3:
        x = jnp.squeeze(x, axis=1)
    B, C, L = x.shape
    pad = mem_depth - 1
    L_out = L + pad
    xp = jnp.pad(x, ((0, 0), (0, 0), (pad, pad)))
    conv = sum(jnp.einsum('bct,ck->bkt', xp[:, :, j:j + L_out], wc[j])
               for j in range(mem_depth)) + bc[0][None, :, None]
    h = jnp.maximum(conv, 0.0)
    pooled = jnp.mean(h, axis=2)
    h1 = jnp.maximum(pooled @ w1 + b1[0], 0.0)
    logits = h1 @ w2 + b2[0]
    logp = logits - jax.nn.logsumexp(logits, axis=1, keepdims=True)
    return logp.reshape(B, -1)[:, :min(num_classes, L)]


if __name__ == "__main__":
    # Module-consistent small shapes: batch=2, num_features=4, seq_len=16,
    # num_kernels=8, mem_depth=3, num_classes=10, hidden=1024 (fixed by module).
    num_classes, num_features, num_kernels, mem_depth = 10, 4, 8, 3

    key = jax.random.PRNGKey(0)
    kx, kp = jax.random.split(key)
    x = jax.random.normal(kx, (2, 1, num_features, 16), jnp.float32)  # (B, 1, C, L)

    raw_params = init_params(kp, num_classes, num_features, num_kernels, mem_depth)
    params = prepare_params(raw_params)

    fwd = jax.jit(functools.partial(keyword_cnn_forward,
                                    mem_depth=mem_depth, num_classes=num_classes))
    out = fwd(x, params)
    jax.block_until_ready(out)

    assert out.shape == (2, min(num_classes, 16)), out.shape
    assert bool(jnp.all(jnp.isfinite(out)))
    # rows of a log-softmax must sum to ~1 in probability space
    assert bool(jnp.all(jnp.abs(jnp.sum(jnp.exp(out), axis=1) - 1.0) < 1e-3))
    # bf16-MXU kernel vs f32 pure-JAX reference (bf16 operands => ~1e-2 tolerance)
    ref = reference_forward(x, raw_params, mem_depth, num_classes)
    max_err = float(jnp.max(jnp.abs(out - ref)))
    assert max_err < 5e-2, f"max |kernel - ref| = {max_err}"
    print("KERNEL_OK")
</pallas_src>

<mosaic_0001>
module attributes {stable_mosaic.version = 11 : i64} {
  func.func @keyword_cnn_kernel(%arg0: i32, %arg1: i32, %arg2: memref<8x32x12xbf16, #tpu.memory_space<vmem>>, %arg3: memref<12x128xbf16, #tpu.memory_space<vmem>>, %arg4: memref<1x128xf32, #tpu.memory_space<vmem>>, %arg5: memref<128x1024xbf16, #tpu.memory_space<vmem>>, %arg6: memref<1x1024xf32, #tpu.memory_space<vmem>>, %arg7: memref<1024x128xbf16, #tpu.memory_space<vmem>>, %arg8: memref<1x128xf32, #tpu.memory_space<vmem>>, %arg9: memref<8x128xf32, #tpu.memory_space<vmem>>, %arg10: memref<8x128xf32, #tpu.memory_space<vmem>>) attributes {dimension_semantics = [#tpu.dimension_semantics<parallel>, #tpu.dimension_semantics<arbitrary>], iteration_bounds = array<i64: 1, 1>, scalar_prefetch = 0 : i64, scratch_operands = 1 : i64, tpu.core_type = #tpu.core_type<tc>, window_params = [{transform_indices = @transform_0, window_bounds = array<i64: 8, 32, 12>}, {pipeline_mode = #tpu.pipeline_mode<synchronous>, transform_indices = @transform_1, window_bounds = array<i64: 12, 128>}, {pipeline_mode = #tpu.pipeline_mode<synchronous>, transform_indices = @transform_2, window_bounds = array<i64: 1, 128>}, {pipeline_mode = #tpu.pipeline_mode<synchronous>, transform_indices = @transform_3, window_bounds = array<i64: 128, 1024>}, {pipeline_mode = #tpu.pipeline_mode<synchronous>, transform_indices = @transform_4, window_bounds = array<i64: 1, 1024>}, {pipeline_mode = #tpu.pipeline_mode<synchronous>, transform_indices = @transform_5, window_bounds = array<i64: 1024, 128>}, {pipeline_mode = #tpu.pipeline_mode<synchronous>, transform_indices = @transform_6, window_bounds = array<i64: 1, 128>}, {transform_indices = @transform_7, window_bounds = array<i64: 8, 128>}]} {
    %c0_i32 = arith.constant 0 : i32
    %0 = arith.cmpi eq, %arg1, %c0_i32 : i32
    %1 = arith.extui %0 : i1 to i32
    %c0_i32_0 = arith.constant 0 : i32
    %2 = arith.cmpi ne, %1, %c0_i32_0 : i32
    scf.if %2 {
      %cst_16 = arith.constant 0.000000e+00 : f32
      %31 = vector.broadcast %cst_16 : f32 to vector<8x128xf32>
      %c0_17 = arith.constant 0 : index
      %c0_18 = arith.constant 0 : index
      %32 = vector.load %arg10[%c0_17, %c0_18] : memref<8x128xf32, #tpu.memory_space<vmem>>, vector<8x128xf32>
      tpu.vector_store %arg10[%c0_17, %c0_18], %31 {strides = array<i32>} : memref<8x128xf32, #tpu.memory_space<vmem>>, vector<8x128xf32>,
    } else {
    }
    %c0 = arith.constant 0 : index
    %c0_1 = arith.constant 0 : index
    %c0_2 = arith.constant 0 : index
    %3 = vector.load %arg2[%c0, %c0_1, %c0_2] : memref<8x32x12xbf16, #tpu.memory_space<vmem>>, vector<8x32x12xbf16>
    %4 = vector.shape_cast %3 : vector<8x32x12xbf16> to vector<256x12xbf16>
    %c0_3 = arith.constant 0 : index
    %c0_4 = arith.constant 0 : index
    %5 = vector.load %arg3[%c0_3, %c0_4] : memref<12x128xbf16, #tpu.memory_space<vmem>>, vector<12x128xbf16>
    %cst = arith.constant dense<0.000000e+00> : vector<256x128xf32>
    %6 = tpu.matmul %4, %5, %cst {dimension_numbers = #tpu.dot_dimension_numbers<[1], [0], [0], [1], [0, 0, 1, 1], [], []>} : vector<256x12xbf16>, vector<12x128xbf16>, vector<256x128xf32> -> vector<256x128xf32>
    %7 = vector.shape_cast %6 : vector<256x128xf32> to vector<8x32x128xf32>
    %c0_5 = arith.constant 0 : index
    %c0_6 = arith.constant 0 : index
    %8 = vector.load %arg4[%c0_5, %c0_6] : memref<1x128xf32, #tpu.memory_space<vmem>>, vector<1x128xf32>
    %9 = vector.shape_cast %8 : vector<1x128xf32> to vector<1x1x128xf32>
    %10 = vector.broadcast %9 : vector<1x1x128xf32> to vector<8x32x128xf32>
    %11 = arith.addf %7, %10 : vector<8x32x128xf32>
    %cst_7 = arith.constant 0.000000e+00 : f32
    %12 = vector.broadcast %cst_7 : f32 to vector<8x32x128xf32>
    %13 = arith.maximumf %11, %12 : vector<8x32x128xf32>
    %c32_i32 = arith.constant 32 : i32
    %14 = arith.muli %arg1, %c32_i32 : i32
    %15 = tpu.iota {dimensions = array<i32: 1>} : vector<1x32x1xi32>
    %16 = vector.broadcast %14 : i32 to vector<1x32x1xi32>
    %17 = arith.addi %16, %15 : vector<1x32x1xi32>
    %c18_i32 = arith.constant 18 : i32
    %18 = vector.broadcast %c18_i32 : i32 to vector<1x32x1xi32>
    %19 = arith.cmpi slt, %17, %18 : vector<1x32x1xi32>
    %cst_8 = arith.constant 0.000000e+00 : f32
    %20 = vector.shape_cast %19 : vector<1x32x1xi1> to vector<1x32x1xi1>
    %21 = vector.broadcast %20 : vector<1x32x1xi1> to vector<8x32x128xi1>
    %22 = vector.broadcast %cst_8 : f32 to vector<8x32x128xf32>
    %23 = arith.select %21, %13, %22 : vector<8x32x128xi1>, vector<8x32x128xf32>
    %c0_9 = arith.constant 0 : index
    %c0_10 = arith.constant 0 : index
    %24 = vector.load %arg10[%c0_9, %c0_10] : memref<8x128xf32, #tpu.memory_space<vmem>>, vector<8x128xf32>
    %cst_11 = arith.constant dense<0.000000e+00> : vector<8x128xf32>
    %25 = vector.multi_reduction <add>, %23, %cst_11 [1] : vector<8x32x128xf32> to vector<8x128xf32>
    %26 = arith.addf %24, %25 : vector<8x128xf32>
    %c0_12 = arith.constant 0 : index
    %c0_13 = arith.constant 0 : index
    %27 = vector.load %arg10[%c0_12, %c0_13] : memref<8x128xf32, #tpu.memory_space<vmem>>, vector<8x128xf32>
    tpu.vector_store %arg10[%c0_12, %c0_13], %26 {strides = array<i32>} : memref<8x128xf32, #tpu.memory_space<vmem>>, vector<8x128xf32>,
    %c0_i32_14 = arith.constant 0 : i32
    %28 = arith.cmpi eq, %arg1, %c0_i32_14 : i32
    %29 = arith.extui %28 : i1 to i32
    %c0_i32_15 = arith.constant 0 : i32
    %30 = arith.cmpi ne, %29, %c0_i32_15 : i32
    scf.if %30 {
      %c0_16 = arith.constant 0 : index
      %c0_17 = arith.constant 0 : index
      %31 = vector.load %arg10[%c0_16, %c0_17] : memref<8x128xf32, #tpu.memory_space<vmem>>, vector<8x128xf32>
      %cst_18 = arith.constant 0.055555556 : f32
      %32 = vector.broadcast %cst_18 : f32 to vector<8x128xf32>
      %33 = arith.mulf %31, %32 : vector<8x128xf32>
      %34 = arith.truncf %33 : vector<8x128xf32> to vector<8x128xbf16>
      %c0_19 = arith.constant 0 : index
      %c0_20 = arith.constant 0 : index
      %35 = vector.load %arg5[%c0_19, %c0_20] : memref<128x1024xbf16, #tpu.memory_space<vmem>>, vector<128x1024xbf16>
      %cst_21 = arith.constant dense<0.000000e+00> : vector<8x1024xf32>
      %36 = tpu.matmul %34, %35, %cst_21 {dimension_numbers = #tpu.dot_dimension_numbers<[1], [0], [0], [1], [0, 0, 1, 1], [], []>} : vector<8x128xbf16>, vector<128x1024xbf16>, vector<8x1024xf32> -> vector<8x1024xf32>
      %c0_22 = arith.constant 0 : index
      %c0_23 = arith.constant 0 : index
      %37 = vector.load %arg6[%c0_22, %c0_23] : memref<1x1024xf32, #tpu.memory_space<vmem>>, vector<1x1024xf32>
      %38 = vector.broadcast %37 : vector<1x1024xf32> to vector<8x1024xf32>
      %39 = arith.addf %36, %38 : vector<8x1024xf32>
      %cst_24 = arith.constant 0.000000e+00 : f32
      %40 = vector.broadcast %cst_24 : f32 to vector<8x1024xf32>
      %41 = arith.maximumf %39, %40 : vector<8x1024xf32>
      %42 = arith.truncf %41 : vector<8x1024xf32> to vector<8x1024xbf16>
      %c0_25 = arith.constant 0 : index
      %c0_26 = arith.constant 0 : index
      %43 = vector.load %arg7[%c0_25, %c0_26] : memref<1024x128xbf16, #tpu.memory_space<vmem>>, vector<1024x128xbf16>
      %cst_27 = arith.constant dense<0.000000e+00> : vector<8x128xf32>
      %44 = tpu.matmul %42, %43, %cst_27 {dimension_numbers = #tpu.dot_dimension_numbers<[1], [0], [0], [1], [0, 0, 1, 1], [], []>} : vector<8x1024xbf16>, vector<1024x128xbf16>, vector<8x128xf32> -> vector<8x128xf32>
      %c0_28 = arith.constant 0 : index
      %c0_29 = arith.constant 0 : index
      %45 = vector.load %arg8[%c0_28, %c0_29] : memref<1x128xf32, #tpu.memory_space<vmem>>, vector<1x128xf32>
      %46 = vector.broadcast %45 : vector<1x128xf32> to vector<8x128xf32>
      %47 = arith.addf %44, %46 : vector<8x128xf32>
      %cst_30 = arith.constant dense<0xFF800000> : vector<8xf32>
      %48 = vector.multi_reduction <maximumf>, %47, %cst_30 [1] : vector<8x128xf32> to vector<8xf32>
      %49 = vector.shape_cast %48 : vector<8xf32> to vector<8x1xf32>
      %50 = vector.broadcast %49 : vector<8x1xf32> to vector<8x128xf32>
      %51 = arith.subf %47, %50 : vector<8x128xf32>
      %52 = math.exp %51 : vector<8x128xf32>
      %cst_31 = arith.constant dense<0.000000e+00> : vector<8xf32>
      %53 = vector.multi_reduction <add>, %52, %cst_31 [1] : vector<8x128xf32> to vector<8xf32>
      %54 = vector.shape_cast %53 : vector<8xf32> to vector<8x1xf32>
      %55 = math.log %54 : vector<8x1xf32>
      %56 = vector.broadcast %55 : vector<8x1xf32> to vector<8x128xf32>
      %57 = arith.subf %51, %56 : vector<8x128xf32>
      %c0_32 = arith.constant 0 : index
      %c0_33 = arith.constant 0 : index
      %58 = vector.load %arg9[%c0_32, %c0_33] : memref<8x128xf32, #tpu.memory_space<vmem>>, vector<8x128xf32>
      tpu.vector_store %arg9[%c0_32, %c0_33], %57 {strides = array<i32>} : memref<8x128xf32, #tpu.memory_space<vmem>>, vector<8x128xf32>,
    } else {
    }
    return
  }
  func.func @transform_0(%arg0: i32, %arg1: i32) -> (i32, i32, i32) {
    %c0_i32 = arith.constant 0 : i32
    %c0_i32_0 = arith.constant 0 : i32
    return %arg0, %arg1, %c0_i32 : i32, i32, i32
  }
  func.func @transform_1(%arg0: i32, %arg1: i32) -> (i32, i32) {
    %c0_i32 = arith.constant 0 : i32
    %c0_i32_0 = arith.constant 0 : i32
    %c0_i32_1 = arith.constant 0 : i32
    return %c0_i32, %c0_i32_0 : i32, i32
  }
  func.func @transform_2(%arg0: i32, %arg1: i32) -> (i32, i32) {
    %c0_i32 = arith.constant 0 : i32
    %c0_i32_0 = arith.constant 0 : i32
    %c0_i32_1 = arith.constant 0 : i32
    return %c0_i32, %c0_i32_0 : i32, i32
  }
  func.func @transform_3(%arg0: i32, %arg1: i32) -> (i32, i32) {
    %c0_i32 = arith.constant 0 : i32
    %c0_i32_0 = arith.constant 0 : i32
    %c0_i32_1 = arith.constant 0 : i32
    return %c0_i32, %c0_i32_0 : i32, i32
  }
  func.func @transform_4(%arg0: i32, %arg1: i32) -> (i32, i32) {
    %c0_i32 = arith.constant 0 : i32
    %c0_i32_0 = arith.constant 0 : i32
    %c0_i32_1 = arith.constant 0 : i32
    return %c0_i32, %c0_i32_0 : i32, i32
  }
  func.func @transform_5(%arg0: i32, %arg1: i32) -> (i32, i32) {
    %c0_i32 = arith.constant 0 : i32
    %c0_i32_0 = arith.constant 0 : i32
    %c0_i32_1 = arith.constant 0 : i32
    return %c0_i32, %c0_i32_0 : i32, i32
  }
  func.func @transform_6(%arg0: i32, %arg1: i32) -> (i32, i32) {
    %c0_i32 = arith.constant 0 : i32
    %c0_i32_0 = arith.constant 0 : i32
    %c0_i32_1 = arith.constant 0 : i32
    return %c0_i32, %c0_i32_0 : i32, i32
  }
  func.func @transform_7(%arg0: i32, %arg1: i32) -> (i32, i32) {
    %c0_i32 = arith.constant 0 : i32
    %c0_i32_0 = arith.constant 0 : i32
    return %arg0, %c0_i32 : i32, i32
  }
}

</mosaic_0001>

<llo_original>
// kernel: keyword_cnn_forward.1
$region0: #{keyword_cnn_forward.1}
  #allocation0 [shape = 'u32[]', space=smem, size = 0x4, offset = 0x4, fixed_abs, tag = 'smem constant byte address 0x4 - core index']
  #allocation1 [shape = 'u32[72,128]{1,0:T(1,128)}', space=vmem, size = 0x9000, scoped, tag = 'internal scratch']
  #allocation2 [shape = 'f32[8,128]{1,0:T(8,128)}', space=vmem, size = 0x1000, scoped, tag = 'scratch operand']
  %s0 = inlined_call_operand.vmem [shape: bf16[8,32,12], index: 0, kind: input, shape index: {}]
  %s1 = inlined_call_operand.vmem [shape: bf16[12,128], index: 1, kind: input, shape index: {}]
  %s2 = inlined_call_operand.vmem [shape: f32[1,128], index: 2, kind: input, shape index: {}]
  %s3 = inlined_call_operand.vmem [shape: bf16[128,1024], index: 3, kind: input, shape index: {}]
  %s4 = inlined_call_operand.vmem [shape: f32[1,1024], index: 4, kind: input, shape index: {}]
  %s5 = inlined_call_operand.vmem [shape: bf16[1024,128], index: 5, kind: input, shape index: {}]
  %s6 = inlined_call_operand.vmem [shape: f32[1,128], index: 6, kind: input, shape index: {}]
  %s7 = inlined_call_operand.vmem [shape: f32[8,128], index: 7, kind: output, shape index: {}]
  %s8 = sld [smem:[#allocation0]]
  $region46: #{keyword_cnn_forward.1} parent=0
    _
  %s10 = ssub.s32 1, %s8
  %s11 = scalar_select 0, %s10, %s8
  // Predicated region
  $region2: #{keyword_cnn_forward.1} parent=0 // pred_check
    _
  $region3: #{keyword_cnn_forward.1} parent=0 // pred_check_branch
    %13 = sbr.rel (0) target = $region5
  $region4: #{keyword_cnn_forward.1} parent=0 // pred_region
    _
  $region5: #{keyword_cnn_forward.1} parent=0 // pred_fallthru
    _
  // Predicated region
  $region6: #{keyword_cnn_forward.1} parent=0 // pred_check
    _
  $region7: #{keyword_cnn_forward.1} parent=0 // pred_check_branch
    %15 = sbr.rel (0) target = $region9
  $region8: #{keyword_cnn_forward.1} parent=0 // pred_region
    _
  $region9: #{keyword_cnn_forward.1} parent=0 // pred_fallthru
    _
  // Predicated region
  $region10: #{keyword_cnn_forward.1} parent=0 // pred_check
    _
  $region11: #{keyword_cnn_forward.1} parent=0 // pred_check_branch
    %17 = sbr.rel (0) target = $region13
  $region12: #{keyword_cnn_forward.1} parent=0 // pred_region
    _
  $region13: #{keyword_cnn_forward.1} parent=0 // pred_fallthru
    _
  // Predicated region
  $region14: #{keyword_cnn_forward.1} parent=0 // pred_check
    _
  $region15: #{keyword_cnn_forward.1} parent=0 // pred_check_branch
    %19 = sbr.rel (0) target = $region17
  $region16: #{keyword_cnn_forward.1} parent=0 // pred_region
    _
  $region17: #{keyword_cnn_forward.1} parent=0 // pred_fallthru
    _
  // Predicated region
  $region18: #{keyword_cnn_forward.1} parent=0 // pred_check
    _
  $region19: #{keyword_cnn_forward.1} parent=0 // pred_check_branch
    %21 = sbr.rel (0) target = $region21
  $region20: #{keyword_cnn_forward.1} parent=0 // pred_region
    _
  $region21: #{keyword_cnn_forward.1} parent=0 // pred_fallthru
    _
  // Predicated region
  $region22: #{keyword_cnn_forward.1} parent=0 // pred_check
    _
  $region23: #{keyword_cnn_forward.1} parent=0 // pred_check_branch
    %23 = sbr.rel (0) target = $region25
  $region24: #{keyword_cnn_forward.1} parent=0 // pred_region
    _
  $region25: #{keyword_cnn_forward.1} parent=0 // pred_fallthru
    _
  // Predicated region
  $region26: #{keyword_cnn_forward.1} parent=0 // pred_check
    _
  $region27: #{keyword_cnn_forward.1} parent=0 // pred_check_branch
    %25 = sbr.rel (0) target = $region29
  $region28: #{keyword_cnn_forward.1} parent=0 // pred_region
    _
  $region29: #{keyword_cnn_forward.1} parent=0 // pred_fallthru
    _
  %p27 = scmp.eq.s32.totalorder 0, 0
  // Predicated region
  $region30: #{keyword_cnn_forward.1} parent=0 // pred_check
    %p28 = pneg %p27
  $region31: #{keyword_cnn_forward.1} parent=0 // pred_check_branch
    %30 = sbr.rel (%p28) target = $region33
  $region32: #{keyword_cnn_forward.1} parent=0 // pred_region
    %31 = vst [vmem:[#allocation2] sm:$0xff] 0.0
  $region33: #{keyword_cnn_forward.1} parent=0 // pred_fallthru
    _
  %v32 = vld [vmem:[%s0] sm:$0xf]
  %v33 = vld [vmem:[%s0 + $0x4] sm:$0xf]
  %v34 = vld [vmem:[%s0 + $0x8] sm:$0xf]
  %v35 = vld [vmem:[%s0 + $0xc] sm:$0xf]
  %v36 = vld [vmem:[%s0 + $0x10] sm:$0xf]
  %v37 = vld [vmem:[%s0 + $0x14] sm:$0xf]
  %v38 = vld [vmem:[%s0 + $0x18] sm:$0xf]
  %v39 = vld [vmem:[%s0 + $0x1c] sm:$0xf]
  %v40 = vld [vmem:[%s0 + $0x20] sm:$0xf]
  %v41 = vld [vmem:[%s0 + $0x24] sm:$0xf]
  %v42 = vld [vmem:[%s0 + $0x28] sm:$0xf]
  %v43 = vld [vmem:[%s0 + $0x2c] sm:$0xf]
  %v44 = vld [vmem:[%s0 + $0x30] sm:$0xf]
  %v45 = vld [vmem:[%s0 + $0x34] sm:$0xf]
  %v46 = vld [vmem:[%s0 + $0x38] sm:$0xf]
  %v47 = vld [vmem:[%s0 + $0x3c] sm:$0xf]
  %v48 = vld [vmem:[%s0 + $0x40] sm:$0xf]
  %v49 = vld [vmem:[%s0 + $0x44] sm:$0xf]
  %v50 = vld [vmem:[%s0 + $0x48] sm:$0xf]
  %v51 = vld [vmem:[%s0 + $0x4c] sm:$0xf]
  %v52 = vld [vmem:[%s0 + $0x50] sm:$0xf]
  %v53 = vld [vmem:[%s0 + $0x54] sm:$0xf]
  %v54 = vld [vmem:[%s0 + $0x58] sm:$0xf]
  %v55 = vld [vmem:[%s0 + $0x5c] sm:$0xf]
  %v56 = vld [vmem:[%s0 + $0x60] sm:$0xf]
  %v57 = vld [vmem:[%s0 + $0x64] sm:$0xf]
  %v58 = vld [vmem:[%s0 + $0x68] sm:$0xf]
  %v59 = vld [vmem:[%s0 + $0x6c] sm:$0xf]
  %v60 = vld [vmem:[%s0 + $0x70] sm:$0xf]
  %v61 = vld [vmem:[%s0 + $0x74] sm:$0xf]
  %v62 = vld [vmem:[%s0 + $0x78] sm:$0xf]
  %v63 = vld [vmem:[%s0 + $0x7c] sm:$0xf]
  %v64 = vld [vmem:[%s1] sm:$0xf]
  %v65 = vld [vmem:[%s1 + $0x4] sm:$0x3]
  %v98 = vunpack.c.l.b16 %v32
  %v99 = vunpack.c.l.b16 %v33
  %v100 = vunpack.c.l.b16 %v34
  %v101 = vunpack.c.l.b16 %v35
  %v102 = vunpack.c.l.b16 %v36
  %v103 = vunpack.c.l.b16 %v37
  %v104 = vunpack.c.l.b16 %v38
  %v105 = vunpack.c.l.b16 %v39
  %v106 = vunpack.c.l.b16 %v40
  %v107 = vunpack.c.l.b16 %v41
  %v108 = vunpack.c.l.b16 %v42
  %v109 = vunpack.c.l.b16 %v43
  %v110 = vunpack.c.l.b16 %v44
  %v111 = vunpack.c.l.b16 %v45
  %v112 = vunpack.c.l.b16 %v46
  %v113 = vunpack.c.l.b16 %v47
  %v114 = vunpack.c.l.b16 %v48
  %v115 = vunpack.c.l.b16 %v49
  %v116 = vunpack.c.l.b16 %v50
  %v117 = vunpack.c.l.b16 %v51
  %v118 = vunpack.c.l.b16 %v52
  %v119 = vunpack.c.l.b16 %v53
  %v120 = vunpack.c.l.b16 %v54
  %v121 = vunpack.c.l.b16 %v55
  %v122 = vunpack.c.l.b16 %v56
  %v123 = vunpack.c.l.b16 %v57
  %v124 = vunpack.c.l.b16 %v58
  %v125 = vunpack.c.l.b16 %v59
  %v126 = vunpack.c.l.b16 %v60
  %v127 = vunpack.c.l.b16 %v61
  %v128 = vunpack.c.l.b16 %v62
  %v129 = vunpack.c.l.b16 %v63
  %v130 = vpack.c.b16 %v99, %v98
  %v131 = vpack.c.b16 %v101, %v100
  %v132 = vpack.c.b16 %v103, %v102
  %v133 = vpack.c.b16 %v105, %v104
  %v134 = vpack.c.b16 %v107, %v106
  %v135 = vpack.c.b16 %v109, %v108
  %v136 = vpack.c.b16 %v111, %v110
  %v137 = vpack.c.b16 %v113, %v112
  %v138 = vpack.c.b16 %v115, %v114
  %v139 = vpack.c.b16 %v117, %v116
  %v140 = vpack.c.b16 %v119, %v118
  %v141 = vpack.c.b16 %v121, %v120
  %v142 = vpack.c.b16 %v123, %v122
  %v143 = vpack.c.b16 %v125, %v124
  %v144 = vpack.c.b16 %v127, %v126
  %v145 = vpack.c.b16 %v129, %v128
  %v148 = vunpack.c.l.b16 %v64
  %v149 = vunpack.c.l.b16 %v65
  %v150 = vpack.c.b16 %v149, %v148
  %vm151 = vcmask 97280
  %v153 = vsel %vm151, %v130, 0
  %v156 = vsel %vm151, %v131, 0
  %v159 = vsel %vm151, %v132, 0
  %v162 = vsel %vm151, %v133, 0
  %v165 = vsel %vm151, %v134, 0
  %v168 = vsel %vm151, %v135, 0
  %v171 = vsel %vm151, %v136, 0
  %v174 = vsel %vm151, %v137, 0
  %v177 = vsel %vm151, %v138, 0
  %v180 = vsel %vm151, %v139, 0
  %v183 = vsel %vm151, %v140, 0
  %v186 = vsel %vm151, %v141, 0
  %v189 = vsel %vm151, %v142, 0
  %v192 = vsel %vm151, %v143, 0
  %v195 = vsel %vm151, %v144, 0
  %v198 = vsel %vm151, %v145, 0
  %vm200 = vcmask 1045504
  %v202 = vsel %vm200, %v150, 0
  %204 = vmatpush.bf16.msra.mxu0 0
  %205 = vmatpush.bf16.msra.mxu0 0
  %206 = vmatpush.bf16.msra.mxu0 0
  %207 = vmatpush.bf16.msra.mxu0 0
  %208 = vmatpush.bf16.msra.mxu0 0
  %209 = vmatpush.bf16.msra.mxu0 0
  %210 = vmatpush.bf16.msra.mxu0 0
  %211 = vmatpush.bf16.msra.mxu0 %v202
  %212 = vmatmul.bf16.gmra.mxu0 %v153
  %v213 = vpop.f32.mrf.mxu0
  %v214 = vadd.f32 0.0, %v213
  %v215 = vpop.f32.mrf.mxu0
  %v216 = vadd.f32 0.0, %v215
  %217 = vmatmul.bf16.gmra.mxu0 %v156
  %v218 = vpop.f32.mrf.mxu0
  %v219 = vadd.f32 0.0, %v218
  %v220 = vpop.f32.mrf.mxu0
  %v221 = vadd.f32 0.0, %v220
  %222 = vmatmul.bf16.gmra.mxu0 %v159
  %v223 = vpop.f32.mrf.mxu0
  %v224 = vadd.f32 0.0, %v223
  %v225 = vpop.f32.mrf.mxu0
  %v226 = vadd.f32 0.0, %v225
  %227 = vmatmul.bf16.gmra.mxu0 %v162
  %v228 = vpop.f32.mrf.mxu0
  %v229 = vadd.f32 0.0, %v228
  %v230 = vpop.f32.mrf.mxu0
  %v231 = vadd.f32 0.0, %v230
  %232 = vmatmul.bf16.gmra.mxu0 %v165
  %v233 = vpop.f32.mrf.mxu0
  %v234 = vadd.f32 0.0, %v233
  %v235 = vpop.f32.mrf.mxu0
  %v236 = vadd.f32 0.0, %v235
  %237 = vmatmul.bf16.gmra.mxu0 %v168
  %v238 = vpop.f32.mrf.mxu0
  %v239 = vadd.f32 0.0, %v238
  %v240 = vpop.f32.mrf.mxu0
  %v241 = vadd.f32 0.0, %v240
  %242 = vmatmul.bf16.gmra.mxu0 %v171
  %v243 = vpop.f32.mrf.mxu0
  %v244 = vadd.f32 0.0, %v243
  %v245 = vpop.f32.mrf.mxu0
  %v246 = vadd.f32 0.0, %v245
  %247 = vmatmul.bf16.gmra.mxu0 %v174
  %v248 = vpop.f32.mrf.mxu0
  %v249 = vadd.f32 0.0, %v248
  %v250 = vpop.f32.mrf.mxu0
  %v251 = vadd.f32 0.0, %v250
  %252 = vmatmul.bf16.gmra.mxu0 %v177
  %v253 = vpop.f32.mrf.mxu0
  %v254 = vadd.f32 0.0, %v253
  %v255 = vpop.f32.mrf.mxu0
  %v256 = vadd.f32 0.0, %v255
  %257 = vmatmul.bf16.gmra.mxu0 %v180
  %v258 = vpop.f32.mrf.mxu0
  %v259 = vadd.f32 0.0, %v258
  %v260 = vpop.f32.mrf.mxu0
  %v261 = vadd.f32 0.0, %v260
  %262 = vmatmul.bf16.gmra.mxu0 %v183
  %v263 = vpop.f32.mrf.mxu0
  %v264 = vadd.f32 0.0, %v263
  %v265 = vpop.f32.mrf.mxu0
  %v266 = vadd.f32 0.0, %v265
  %267 = vmatmul.bf16.gmra.mxu0 %v186
  %v268 = vpop.f32.mrf.mxu0
  %v269 = vadd.f32 0.0, %v268
  %v270 = vpop.f32.mrf.mxu0
  %v271 = vadd.f32 0.0, %v270
  %272 = vmatmul.bf16.gmra.mxu0 %v189
  %v273 = vpop.f32.mrf.mxu0
  %v274 = vadd.f32 0.0, %v273
  %v275 = vpop.f32.mrf.mxu0
  %v276 = vadd.f32 0.0, %v275
  %277 = vmatmul.bf16.gmra.mxu0 %v192
  %v278 = vpop.f32.mrf.mxu0
  %v279 = vadd.f32 0.0, %v278
  %v280 = vpop.f32.mrf.mxu0
  %v281 = vadd.f32 0.0, %v280
  %282 = vmatmul.bf16.gmra.mxu0 %v195
  %v283 = vpop.f32.mrf.mxu0
  %v284 = vadd.f32 0.0, %v283
  %v285 = vpop.f32.mrf.mxu0
  %v286 = vadd.f32 0.0, %v285
  %287 = vmatmul.bf16.gmra.mxu0 %v198
  %v288 = vpop.f32.mrf.mxu0
  %v289 = vadd.f32 0.0, %v288
  %v290 = vpop.f32.mrf.mxu0
  %v291 = vadd.f32 0.0, %v290
  %292 = vdwg.mxu0
  %v293 = vld [vmem:[%s2] sm:$0x1]
  %v295 = vperm.slane %v293, 0
  %v297 = vadd.f32 %v214, %v295
  %v298 = vadd.f32 %v216, %v295
  %v299 = vadd.f32 %v219, %v295
  %v300 = vadd.f32 %v221, %v295
  %v301 = vadd.f32 %v224, %v295
  %v302 = vadd.f32 %v226, %v295
  %v303 = vadd.f32 %v229, %v295
  %v304 = vadd.f32 %v231, %v295
  %v305 = vadd.f32 %v234, %v295
  %v306 = vadd.f32 %v236, %v295
  %v307 = vadd.f32 %v239, %v295
  %v308 = vadd.f32 %v241, %v295
  %v309 = vadd.f32 %v244, %v295
  %v310 = vadd.f32 %v246, %v295
  %v311 = vadd.f32 %v249, %v295
  %v312 = vadd.f32 %v251, %v295
  %v313 = vadd.f32 %v254, %v295
  %v314 = vadd.f32 %v256, %v295
  %v315 = vadd.f32 %v259, %v295
  %v316 = vadd.f32 %v261, %v295
  %v317 = vadd.f32 %v264, %v295
  %v318 = vadd.f32 %v266, %v295
  %v319 = vadd.f32 %v269, %v295
  %v320 = vadd.f32 %v271, %v295
  %v321 = vadd.f32 %v274, %v295
  %v322 = vadd.f32 %v276, %v295
  %v323 = vadd.f32 %v279, %v295
  %v324 = vadd.f32 %v281, %v295
  %v325 = vadd.f32 %v284, %v295
  %v326 = vadd.f32 %v286, %v295
  %v327 = vadd.f32 %v289, %v295
  %v328 = vadd.f32 %v291, %v295
  %v329 = vmax.f32 %v297, 0.0
  %v330 = vmax.f32 %v298, 0.0
  %v331 = vmax.f32 %v299, 0.0
  %v332 = vmax.f32 %v300, 0.0
  %v333 = vmax.f32 %v301, 0.0
  %v334 = vmax.f32 %v302, 0.0
  %v335 = vmax.f32 %v303, 0.0
  %v336 = vmax.f32 %v304, 0.0
  %v337 = vmax.f32 %v305, 0.0
  %v338 = vmax.f32 %v306, 0.0
  %v339 = vmax.f32 %v307, 0.0
  %v340 = vmax.f32 %v308, 0.0
  %v341 = vmax.f32 %v309, 0.0
  %v342 = vmax.f32 %v310, 0.0
  %v343 = vmax.f32 %v311, 0.0
  %v344 = vmax.f32 %v312, 0.0
  %v345 = vmax.f32 %v313, 0.0
  %v346 = vmax.f32 %v314, 0.0
  %v347 = vmax.f32 %v315, 0.0
  %v348 = vmax.f32 %v316, 0.0
  %v349 = vmax.f32 %v317, 0.0
  %v350 = vmax.f32 %v318, 0.0
  %v351 = vmax.f32 %v319, 0.0
  %v352 = vmax.f32 %v320, 0.0
  %v353 = vmax.f32 %v321, 0.0
  %v354 = vmax.f32 %v322, 0.0
  %v355 = vmax.f32 %v323, 0.0
  %v356 = vmax.f32 %v324, 0.0
  %v357 = vmax.f32 %v325, 0.0
  %v358 = vmax.f32 %v326, 0.0
  %v359 = vmax.f32 %v327, 0.0
  %v360 = vmax.f32 %v328, 0.0
  %s361 = smul.u32 0, 32
  %v362 = vlaneseq
  %v363 = vshrl.u32 %v362, 7
  %v364 = vadd.s32 %v363, 8
  %v365 = vadd.s32 %v363, 16
  %v366 = vadd.s32 %v363, 24
  %v367 = vstv %s361
  %v368 = vadd.s32 %v367, %v363
  %v369 = vadd.s32 %v367, %v364
  %v370 = vadd.s32 %v367, %v365
  %v371 = vadd.s32 %v367, %v366
  %vm372 = vcmp.lt.s32.totalorder %v368, 18
  %vm373 = vcmp.lt.s32.totalorder %v369, 18
  %vm374 = vcmp.lt.s32.totalorder %v370, 18
  %vm375 = vcmp.lt.s32.totalorder %v371, 18
  %v376 = vsel %vm372, 1, 0
  %v377 = vsel %vm373, 1, 0
  %v378 = vsel %vm374, 1, 0
  %v379 = vsel %vm375, 1, 0
  %vm380 = vcmp.eq.s32.totalorder %v376, 1
  %vm381 = vcmp.eq.s32.totalorder %v377, 1
  %vm382 = vcmp.eq.s32.totalorder %v378, 1
  %vm383 = vcmp.eq.s32.totalorder %v379, 1
  %v384 = vsel %vm380, %v329, 0.0
  %v385 = vsel %vm381, %v330, 0.0
  %v386 = vsel %vm382, %v331, 0.0
  %v387 = vsel %vm383, %v332, 0.0
  %v388 = vsel %vm380, %v333, 0.0
  %v389 = vsel %vm381, %v334, 0.0
  %v390 = vsel %vm382, %v335, 0.0
  %v391 = vsel %vm383, %v336, 0.0
  %v392 = vsel %vm380, %v337, 0.0
  %v393 = vsel %vm381, %v338, 0.0
  %v394 = vsel %vm382, %v339, 0.0
  %v395 = vsel %vm383, %v340, 0.0
  %v396 = vsel %vm380, %v341, 0.0
  %v397 = vsel %vm381, %v342, 0.0
  %v398 = vsel %vm382, %v343, 0.0
  %v399 = vsel %vm383, %v344, 0.0
  %v400 = vsel %vm380, %v345, 0.0
  %v401 = vsel %vm381, %v346, 0.0
  %v402 = vsel %vm382, %v347, 0.0
  %v403 = vsel %vm383, %v348, 0.0
  %v404 = vsel %vm380, %v349, 0.0
  %v405 = vsel %vm381, %v350, 0.0
  %v406 = vsel %vm382, %v351, 0.0
  %v407 = vsel %vm383, %v352, 0.0
  %v408 = vsel %vm380, %v353, 0.0
  %v409 = vsel %vm381, %v354, 0.0
  %v410 = vsel %vm382, %v355, 0.0
  %v411 = vsel %vm383, %v356, 0.0
  %v412 = vsel %vm380, %v357, 0.0
  %v413 = vsel %vm381, %v358, 0.0
  %v414 = vsel %vm382, %v359, 0.0
  %v415 = vsel %vm383, %v360, 0.0
  %v416 = vld [vmem:[#allocation2] sm:$0xff]
  %v417 = vadd.f32 %v384, %v385
  %v418 = vadd.f32 %v417, %v386
  %v419 = vadd.f32 %v418, %v387
  %v420 = vrot.slane %v419, 4
  %v421 = vadd.f32 %v419, %v420
  %v422 = vrot.slane %v421, 2
  %v423 = vadd.f32 %v421, %v422
  %v424 = vrot.slane %v423, 1
  %v425 = vadd.f32 %v423, %v424
  %v426 = vadd.f32 %v388, %v389
  %v427 = vadd.f32 %v426, %v390
  %v428 = vadd.f32 %v427, %v391
  %v429 = vrot.slane %v428, 4
  %v430 = vadd.f32 %v428, %v429
  %v431 = vrot.slane %v430, 2
  %v432 = vadd.f32 %v430, %v431
  %v433 = vrot.slane %v432, 1
  %v434 = vadd.f32 %v432, %v433
  %v435 = vadd.f32 %v392, %v393
  %v436 = vadd.f32 %v435, %v394
  %v437 = vadd.f32 %v436, %v395
  %v438 = vrot.slane %v437, 4
  %v439 = vadd.f32 %v437, %v438
  %v440 = vrot.slane %v439, 2
  %v441 = vadd.f32 %v439, %v440
  %v442 = vrot.slane %v441, 1
  %v443 = vadd.f32 %v441, %v442
  %v444 = vadd.f32 %v396, %v397
  %v445 = vadd.f32 %v444, %v398
  %v446 = vadd.f32 %v445, %v399
  %v447 = vrot.slane %v446, 4
  %v448 = vadd.f32 %v446, %v447
  %v449 = vrot.slane %v448, 2
  %v450 = vadd.f32 %v448, %v449
  %v451 = vrot.slane %v450, 1
  %v452 = vadd.f32 %v450, %v451
  %v453 = vadd.f32 %v400, %v401
  %v454 = vadd.f32 %v453, %v402
  %v455 = vadd.f32 %v454, %v403
  %v456 = vrot.slane %v455, 4
  %v457 = vadd.f32 %v455, %v456
  %v458 = vrot.slane %v457, 2
  %v459 = vadd.f32 %v457, %v458
  %v460 = vrot.slane %v459, 1
  %v461 = vadd.f32 %v459, %v460
  %v462 = vadd.f32 %v404, %v405
  %v463 = vadd.f32 %v462, %v406
  %v464 = vadd.f32 %v463, %v407
  %v465 = vrot.slane %v464, 4
  %v466 = vadd.f32 %v464, %v465
  %v467 = vrot.slane %v466, 2
  %v468 = vadd.f32 %v466, %v467
  %v469 = vrot.slane %v468, 1
  %v470 = vadd.f32 %v468, %v469
  %v471 = vadd.f32 %v408, %v409
  %v472 = vadd.f32 %v471, %v410
  %v473 = vadd.f32 %v472, %v411
  %v474 = vrot.slane %v473, 4
  %v475 = vadd.f32 %v473, %v474
  %v476 = vrot.slane %v475, 2
  %v477 = vadd.f32 %v475, %v476
  %v478 = vrot.slane %v477, 1
  %v479 = vadd.f32 %v477, %v478
  %v480 = vadd.f32 %v412, %v413
  %v481 = vadd.f32 %v480, %v414
  %v482 = vadd.f32 %v481, %v415
  %v483 = vrot.slane %v482, 4
  %v484 = vadd.f32 %v482, %v483
  %v485 = vrot.slane %v484, 2
  %v486 = vadd.f32 %v484, %v485
  %v487 = vrot.slane %v486, 1
  %v488 = vadd.f32 %v486, %v487
  %vm497 = vcmask 1041409
  %v498 = vsel %vm497, %v434, %v425
  %vm499 = vcmask 1042434
  %v500 = vsel %vm499, %v443, %v498
  %vm501 = vcmask 1043459
  %v502 = vsel %vm501, %v452, %v500
  %vm503 = vcmask 1044484
  %v504 = vsel %vm503, %v461, %v502
  %vm505 = vcmask 1045509
  %v506 = vsel %vm505, %v470, %v504
  %vm507 = vcmask 1046534
  %v508 = vsel %vm507, %v479, %v506
  %vm509 = vcmask 1047559
  %v510 = vsel %vm509, %v488, %v508
  %v512 = vadd.f32 %v416, %v510
  %513 = vst [vmem:[#allocation2] sm:$0xff] %v512
  // Predicated region
  $region34: #{keyword_cnn_forward.1} parent=0 // pred_check
    %p514 = pneg %p27
  $region35: #{keyword_cnn_forward.1} parent=0 // pred_check_branch
    %516 = sbr.rel (%p514) target = $region37
  $region36: #{keyword_cnn_forward.1} parent=0 // pred_region
    %v517 = vld [vmem:[#allocation2] sm:$0xff]
    %v518 = vmul.f32 %v517, 0.055555556
    %v519 = vpack.c.bf16 %v518, %v518
    %v520 = vld [vmem:[%s3] sm:$0xff]
    %v521 = vld [vmem:[%s3 + $0x8] sm:$0xff]
    %v522 = vld [vmem:[%s3 + $0x10] sm:$0xff]
    %v523 = vld [vmem:[%s3 + $0x18] sm:$0xff]
    %v524 = vld [vmem:[%s3 + $0x20] sm:$0xff]
    %v525 = vld [vmem:[%s3 + $0x28] sm:$0xff]
    %v526 = vld [vmem:[%s3 + $0x30] sm:$0xff]
    %v527 = vld [vmem:[%s3 + $0x38] sm:$0xff]
    %v528 = vld [vmem:[%s3 + $0x40] sm:$0xff]
    %v529 = vld [vmem:[%s3 + $0x48] sm:$0xff]
    %v530 = vld [vmem:[%s3 + $0x50] sm:$0xff]
    %v531 = vld [vmem:[%s3 + $0x58] sm:$0xff]
    %v532 = vld [vmem:[%s3 + $0x60] sm:$0xff]
    %v533 = vld [vmem:[%s3 + $0x68] sm:$0xff]
    %v534 = vld [vmem:[%s3 + $0x70] sm:$0xff]
    %v535 = vld [vmem:[%s3 + $0x78] sm:$0xff]
    %v536 = vld [vmem:[%s3 + $0x80] sm:$0xff]
    %v537 = vld [vmem:[%s3 + $0x88] sm:$0xff]
    %v538 = vld [vmem:[%s3 + $0x90] sm:$0xff]
    %v539 = vld [vmem:[%s3 + $0x98] sm:$0xff]
    %v540 = vld [vmem:[%s3 + $0xa0] sm:$0xff]
    %v541 = vld [vmem:[%s3 + $0xa8] sm:$0xff]
    %v542 = vld [vmem:[%s3 + $0xb0] sm:$0xff]
    %v543 = vld [vmem:[%s3 + $0xb8] sm:$0xff]
    %v544 = vld [vmem:[%s3 + $0xc0] sm:$0xff]
    %v545 = vld [vmem:[%s3 + $0xc8] sm:$0xff]
    %v546 = vld [vmem:[%s3 + $0xd0] sm:$0xff]
    %v547 = vld [vmem:[%s3 + $0xd8] sm:$0xff]
    %v548 = vld [vmem:[%s3 + $0xe0] sm:$0xff]
    %v549 = vld [vmem:[%s3 + $0xe8] sm:$0xff]
    %v550 = vld [vmem:[%s3 + $0xf0] sm:$0xff]
    %v551 = vld [vmem:[%s3 + $0xf8] sm:$0xff]
    %v552 = vld [vmem:[%s3 + $0x100] sm:$0xff]
    %v553 = vld [vmem:[%s3 + $0x108] sm:$0xff]
    %v554 = vld [vmem:[%s3 + $0x110] sm:$0xff]
    %v555 = vld [vmem:[%s3 + $0x118] sm:$0xff]
    %v556 = vld [vmem:[%s3 + $0x120] sm:$0xff]
    %v557 = vld [vmem:[%s3 + $0x128] sm:$0xff]
    %v558 = vld [vmem:[%s3 + $0x130] sm:$0xff]
    %v559 = vld [vmem:[%s3 + $0x138] sm:$0xff]
    %v560 = vld [vmem:[%s3 + $0x140] sm:$0xff]
    %v561 = vld [vmem:[%s3 + $0x148] sm:$0xff]
    %v562 = vld [vmem:[%s3 + $0x150] sm:$0xff]
    %v563 = vld [vmem:[%s3 + $0x158] sm:$0xff]
    %v564 = vld [vmem:[%s3 + $0x160] sm:$0xff]
    %v565 = vld [vmem:[%s3 + $0x168] sm:$0xff]
    %v566 = vld [vmem:[%s3 + $0x170] sm:$0xff]
    %v567 = vld [vmem:[%s3 + $0x178] sm:$0xff]
    %v568 = vld [vmem:[%s3 + $0x180] sm:$0xff]
    %v569 = vld [vmem:[%s3 + $0x188] sm:$0xff]
    %v570 = vld [vmem:[%s3 + $0x190] sm:$0xff]
    %v571 = vld [vmem:[%s3 + $0x198] sm:$0xff]
    %v572 = vld [vmem:[%s3 + $0x1a0] sm:$0xff]
    %v573 = vld [vmem:[%s3 + $0x1a8] sm:$0xff]
    %v574 = vld [vmem:[%s3 + $0x1b0] sm:$0xff]
    %v575 = vld [vmem:[%s3 + $0x1b8] sm:$0xff]
    %v576 = vld [vmem:[%s3 + $0x1c0] sm:$0xff]
    %v577 = vld [vmem:[%s3 + $0x1c8] sm:$0xff]
    %v578 = vld [vmem:[%s3 + $0x1d0] sm:$0xff]
    %v579 = vld [vmem:[%s3 + $0x1d8] sm:$0xff]
    %v580 = vld [vmem:[%s3 + $0x1e0] sm:$0xff]
    %v581 = vld [vmem:[%s3 + $0x1e8] sm:$0xff]
    %v582 = vld [vmem:[%s3 + $0x1f0] sm:$0xff]
    %v583 = vld [vmem:[%s3 + $0x1f8] sm:$0xff]
    %v584 = vld [vmem:[%s4] sm:$0xff]
    %v586 = vperm.slane %v584, 0
    %v587 = vperm.slane %v584, 1
    %v588 = vperm.slane %v584, 2
    %v589 = vperm.slane %v584, 3
    %v590 = vperm.slane %v584, 4
    %v591 = vperm.slane %v584, 5
    %v592 = vperm.slane %v584, 6
    %v593 = vperm.slane %v584, 7
    %v666 = vunpack.c.l.b16 %v520
    %v667 = vunpack.c.h.b16 %v520
    %v668 = vunpack.c.l.b16 %v521
    %v669 = vunpack.c.h.b16 %v521
    %v670 = vunpack.c.l.b16 %v522
    %v671 = vunpack.c.h.b16 %v522
    %v672 = vunpack.c.l.b16 %v523
    %v673 = vunpack.c.h.b16 %v523
    %v674 = vunpack.c.l.b16 %v524
    %v675 = vunpack.c.h.b16 %v524
    %v676 = vunpack.c.l.b16 %v525
    %v677 = vunpack.c.h.b16 %v525
    %v678 = vunpack.c.l.b16 %v526
    %v679 = vunpack.c.h.b16 %v526
    %v680 = vunpack.c.l.b16 %v527
    %v681 = vunpack.c.h.b16 %v527
    %v682 = vunpack.c.l.b16 %v528
    %v683 = vunpack.c.h.b16 %v528
    %v684 = vunpack.c.l.b16 %v529
    %v685 = vunpack.c.h.b16 %v529
    %v686 = vunpack.c.l.b16 %v530
    %v687 = vunpack.c.h.b16 %v530
    %v688 = vunpack.c.l.b16 %v531
    %v689 = vunpack.c.h.b16 %v531
    %v690 = vunpack.c.l.b16 %v532
    %v691 = vunpack.c.h.b16 %v532
    %v692 = vunpack.c.l.b16 %v533
    %v693 = vunpack.c.h.b16 %v533
    %v694 = vunpack.c.l.b16 %v534
    %v695 = vunpack.c.h.b16 %v534
    %v696 = vunpack.c.l.b16 %v535
    %v697 = vunpack.c.h.b16 %v535
    %v698 = vunpack.c.l.b16 %v536
    %v699 = vunpack.c.h.b16 %v536
    %v700 = vunpack.c.l.b16 %v537
    %v701 = vunpack.c.h.b16 %v537
    %v702 = vunpack.c.l.b16 %v538
    %v703 = vunpack.c.h.b16 %v538
    %v704 = vunpack.c.l.b16 %v539
    %v705 = vunpack.c.h.b16 %v539
    %v706 = vunpack.c.l.b16 %v540
    %v707 = vunpack.c.h.b16 %v540
    %v708 = vunpack.c.l.b16 %v541
    %v709 = vunpack.c.h.b16 %v541
    %v710 = vunpack.c.l.b16 %v542
    %v711 = vunpack.c.h.b16 %v542
    %v712 = vunpack.c.l.b16 %v543
    %v713 = vunpack.c.h.b16 %v543
    %v714 = vunpack.c.l.b16 %v544
    %v715 = vunpack.c.h.b16 %v544
    %v716 = vunpack.c.l.b16 %v545
    %v717 = vunpack.c.h.b16 %v545
    %v718 = vunpack.c.l.b16 %v546
    %v719 = vunpack.c.h.b16 %v546
    %v720 = vunpack.c.l.b16 %v547
    %v721 = vunpack.c.h.b16 %v547
    %v722 = vunpack.c.l.b16 %v548
    %v723 = vunpack.c.h.b16 %v548
    %v724 = vunpack.c.l.b16 %v549
    %v725 = vunpack.c.h.b16 %v549
    %v726 = vunpack.c.l.b16 %v550
    %v727 = vunpack.c.h.b16 %v550
    %v728 = vunpack.c.l.b16 %v551
    %v729 = vunpack.c.h.b16 %v551
    %v730 = vunpack.c.l.b16 %v552
    %v731 = vunpack.c.h.b16 %v552
    %v732 = vunpack.c.l.b16 %v553
    %v733 = vunpack.c.h.b16 %v553
    %v734 = vunpack.c.l.b16 %v554
    %v735 = vunpack.c.h.b16 %v554
    %v736 = vunpack.c.l.b16 %v555
    %v737 = vunpack.c.h.b16 %v555
    %v738 = vunpack.c.l.b16 %v556
    %v739 = vunpack.c.h.b16 %v556
    %v740 = vunpack.c.l.b16 %v557
    %v741 = vunpack.c.h.b16 %v557
    %v742 = vunpack.c.l.b16 %v558
    %v743 = vunpack.c.h.b16 %v558
    %v744 = vunpack.c.l.b16 %v559
    %v745 = vunpack.c.h.b16 %v559
    %v746 = vunpack.c.l.b16 %v560
    %v747 = vunpack.c.h.b16 %v560
    %v748 = vunpack.c.l.b16 %v561
    %v749 = vunpack.c.h.b16 %v561
    %v750 = vunpack.c.l.b16 %v562
    %v751 = vunpack.c.h.b16 %v562
    %v752 = vunpack.c.l.b16 %v563
    %v753 = vunpack.c.h.b16 %v563
    %v754 = vunpack.c.l.b16 %v564
    %v755 = vunpack.c.h.b16 %v564
    %v756 = vunpack.c.l.b16 %v565
    %v757 = vunpack.c.h.b16 %v565
    %v758 = vunpack.c.l.b16 %v566
    %v759 = vunpack.c.h.b16 %v566
    %v760 = vunpack.c.l.b16 %v567
    %v761 = vunpack.c.h.b16 %v567
    %v762 = vunpack.c.l.b16 %v568
    %v763 = vunpack.c.h.b16 %v568
    %v764 = vunpack.c.l.b16 %v569
    %v765 = vunpack.c.h.b16 %v569
    %v766 = vunpack.c.l.b16 %v570
    %v767 = vunpack.c.h.b16 %v570
    %v768 = vunpack.c.l.b16 %v571
    %v769 = vunpack.c.h.b16 %v571
    %v770 = vunpack.c.l.b16 %v572
    %v771 = vunpack.c.h.b16 %v572
    %v772 = vunpack.c.l.b16 %v573
    %v773 = vunpack.c.h.b16 %v573
    %v774 = vunpack.c.l.b16 %v574
    %v775 = vunpack.c.h.b16 %v574
    %v776 = vunpack.c.l.b16 %v575
    %v777 = vunpack.c.h.b16 %v575
    %v778 = vunpack.c.l.b16 %v576
    %v779 = vunpack.c.h.b16 %v576
    %v780 = vunpack.c.l.b16 %v577
    %v781 = vunpack.c.h.b16 %v577
    %v782 = vunpack.c.l.b16 %v578
    %v783 = vunpack.c.h.b16 %v578
    %v784 = vunpack.c.l.b16 %v579
    %v785 = vunpack.c.h.b16 %v579
    %v786 = vunpack.c.l.b16 %v580
    %v787 = vunpack.c.h.b16 %v580
    %v788 = vunpack.c.l.b16 %v581
    %v789 = vunpack.c.h.b16 %v581
    %v790 = vunpack.c.l.b16 %v582
    %v791 = vunpack.c.h.b16 %v582
    %v792 = vunpack.c.l.b16 %v583
    %v793 = vunpack.c.h.b16 %v583
    %v794 = vpack.c.b16 %v674, %v666
    %v795 = vpack.c.b16 %v675, %v667
    %v796 = vpack.c.b16 %v676, %v668
    %v797 = vpack.c.b16 %v677, %v669
    %v798 = vpack.c.b16 %v678, %v670
    %v799 = vpack.c.b16 %v679, %v671
    %v800 = vpack.c.b16 %v680, %v672
    %v801 = vpack.c.b16 %v681, %v673
    %v802 = vpack.c.b16 %v690, %v682
    %v803 = vpack.c.b16 %v691, %v683
    %v804 = vpack.c.b16 %v692, %v684
    %v805 = vpack.c.b16 %v693, %v685
    %v806 = vpack.c.b16 %v694, %v686
    %v807 = vpack.c.b16 %v695, %v687
    %v808 = vpack.c.b16 %v696, %v688
    %v809 = vpack.c.b16 %v697, %v689
    %v810 = vpack.c.b16 %v706, %v698
    %v811 = vpack.c.b16 %v707, %v699
    %v812 = vpack.c.b16 %v708, %v700
    %v813 = vpack.c.b16 %v709, %v701
    %v814 = vpack.c.b16 %v710, %v702
    %v815 = vpack.c.b16 %v711, %v703
    %v816 = vpack.c.b16 %v712, %v704
    %v817 = vpack.c.b16 %v713, %v705
    %v818 = vpack.c.b16 %v722, %v714
    %v819 = vpack.c.b16 %v723, %v715
    %v820 = vpack.c.b16 %v724, %v716
    %v821 = vpack.c.b16 %v725, %v717
    %v822 = vpack.c.b16 %v726, %v718
    %v823 = vpack.c.b16 %v727, %v719
    %v824 = vpack.c.b16 %v728, %v720
    %v825 = vpack.c.b16 %v729, %v721
    %v826 = vpack.c.b16 %v738, %v730
    %v827 = vpack.c.b16 %v739, %v731
    %v828 = vpack.c.b16 %v740, %v732
    %v829 = vpack.c.b16 %v741, %v733
    %v830 = vpack.c.b16 %v742, %v734
    %v831 = vpack.c.b16 %v743, %v735
    %v832 = vpack.c.b16 %v744, %v736
    %v833 = vpack.c.b16 %v745, %v737
    %v834 = vpack.c.b16 %v754, %v746
    %v835 = vpack.c.b16 %v755, %v747
    %v836 = vpack.c.b16 %v756, %v748
    %v837 = vpack.c.b16 %v757, %v749
    %v838 = vpack.c.b16 %v758, %v750
    %v839 = vpack.c.b16 %v759, %v751
    %v840 = vpack.c.b16 %v760, %v752
    %v841 = vpack.c.b16 %v761, %v753
    %v842 = vpack.c.b16 %v770, %v762
    %v843 = vpack.c.b16 %v771, %v763
    %v844 = vpack.c.b16 %v772, %v764
    %v845 = vpack.c.b16 %v773, %v765
    %v846 = vpack.c.b16 %v774, %v766
    %v847 = vpack.c.b16 %v775, %v767
    %v848 = vpack.c.b16 %v776, %v768
    %v849 = vpack.c.b16 %v777, %v769
    %v850 = vpack.c.b16 %v786, %v778
    %v851 = vpack.c.b16 %v787, %v779
    %v852 = vpack.c.b16 %v788, %v780
    %v853 = vpack.c.b16 %v789, %v781
    %v854 = vpack.c.b16 %v790, %v782
    %v855 = vpack.c.b16 %v791, %v783
    %v856 = vpack.c.b16 %v792, %v784
    %v857 = vpack.c.b16 %v793, %v785
    %922 = vmatpush.bf16.msra.mxu0 %v850
    %923 = vmatpush.bf16.msra.mxu0 %v842
    %924 = vmatpush.bf16.msra.mxu0 %v834
    %925 = vmatpush.bf16.msra.mxu0 %v826
    %926 = vmatpush.bf16.msra.mxu0 %v818
    %927 = vmatpush.bf16.msra.mxu0 %v810
    %928 = vmatpush.bf16.msra.mxu0 %v802
    %929 = vmatpush.bf16.msra.mxu0 %v794
    %930 = vmatmul.bf16.gmra.mxu0 %v519
    %v931 = vpop.f32.mrf.mxu0
    %v932 = vadd.f32 %v586, %v931
    %v933 = vpop.f32.mrf.mxu0
    %934 = vdwg.mxu0
    %935 = vmatpush.bf16.msra.mxu0 %v851
    %936 = vmatpush.bf16.msra.mxu0 %v843
    %937 = vmatpush.bf16.msra.mxu0 %v835
    %938 = vmatpush.bf16.msra.mxu0 %v827
    %939 = vmatpush.bf16.msra.mxu0 %v819
    %940 = vmatpush.bf16.msra.mxu0 %v811
    %941 = vmatpush.bf16.msra.mxu0 %v803
    %942 = vmatpush.bf16.msra.mxu0 %v795
    %943 = vmatmul.bf16.gmra.mxu0 %v519
    %v944 = vpop.f32.mrf.mxu0
    %v945 = vadd.f32 %v587, %v944
    %v946 = vpop.f32.mrf.mxu0
    %947 = vdwg.mxu0
    %948 = vmatpush.bf16.msra.mxu0 %v852
    %949 = vmatpush.bf16.msra.mxu0 %v844
    %950 = vmatpush.bf16.msra.mxu0 %v836
    %951 = vmatpush.bf16.msra.mxu0 %v828
    %952 = vmatpush.bf16.msra.mxu0 %v820
    %953 = vmatpush.bf16.msra.mxu0 %v812
    %954 = vmatpush.bf16.msra.mxu0 %v804
    %955 = vmatpush.bf16.msra.mxu0 %v796
    %956 = vmatmul.bf16.gmra.mxu0 %v519
    %v957 = vpop.f32.mrf.mxu0
    %v958 = vadd.f32 %v588, %v957
    %v959 = vpop.f32.mrf.mxu0
    %960 = vdwg.mxu0
    %961 = vmatpush.bf16.msra.mxu0 %v853
    %962 = vmatpush.bf16.msra.mxu0 %v845
    %963 = vmatpush.bf16.msra.mxu0 %v837
    %964 = vmatpush.bf16.msra.mxu0 %v829
    %965 = vmatpush.bf16.msra.mxu0 %v821
    %966 = vmatpush.bf16.msra.mxu0 %v813
    %967 = vmatpush.bf16.msra.mxu0 %v805
    %968 = vmatpush.bf16.msra.mxu0 %v797
    %969 = vmatmul.bf16.gmra.mxu0 %v519
    %v970 = vpop.f32.mrf.mxu0
    %v971 = vadd.f32 %v589, %v970
    %v972 = vpop.f32.mrf.mxu0
    %973 = vdwg.mxu0
    %974 = vmatpush.bf16.msra.mxu0 %v854
    %975 = vmatpush.bf16.msra.mxu0 %v846
    %976 = vmatpush.bf16.msra.mxu0 %v838
    %977 = vmatpush.bf16.msra.mxu0 %v830
    %978 = vmatpush.bf16.msra.mxu0 %v822
    %979 = vmatpush.bf16.msra.mxu0 %v814
    %980 = vmatpush.bf16.msra.mxu0 %v806
    %981 = vmatpush.bf16.msra.mxu0 %v798
    %982 = vmatmul.bf16.gmra.mxu0 %v519
    %v983 = vpop.f32.mrf.mxu0
    %v984 = vadd.f32 %v590, %v983
    %v985 = vpop.f32.mrf.mxu0
    %986 = vdwg.mxu0
    %987 = vmatpush.bf16.msra.mxu0 %v855
    %988 = vmatpush.bf16.msra.mxu0 %v847
    %989 = vmatpush.bf16.msra.mxu0 %v839
    %990 = vmatpush.bf16.msra.mxu0 %v831
    %991 = vmatpush.bf16.msra.mxu0 %v823
    %992 = vmatpush.bf16.msra.mxu0 %v815
    %993 = vmatpush.bf16.msra.mxu0 %v807
    %994 = vmatpush.bf16.msra.mxu0 %v799
    %995 = vmatmul.bf16.gmra.mxu0 %v519
    %v996 = vpop.f32.mrf.mxu0
    %v997 = vadd.f32 %v591, %v996
    %v998 = vpop.f32.mrf.mxu0
    %999 = vdwg.mxu0
    %1000 = vmatpush.bf16.msra.mxu0 %v856
    %1001 = vmatpush.bf16.msra.mxu0 %v848
    %1002 = vmatpush.bf16.msra.mxu0 %v840
    %1003 = vmatpush.bf16.msra.mxu0 %v832
    %1004 = vmatpush.bf16.msra.mxu0 %v824
    %1005 = vmatpush.bf16.msra.mxu0 %v816
    %1006 = vmatpush.bf16.msra.mxu0 %v808
    %1007 = vmatpush.bf16.msra.mxu0 %v800
    %1008 = vmatmul.bf16.gmra.mxu0 %v519
    %v1009 = vpop.f32.mrf.mxu0
    %v1010 = vadd.f32 %v592, %v1009
    %v1011 = vpop.f32.mrf.mxu0
    %1012 = vdwg.mxu0
    %1013 = vmatpush.bf16.msra.mxu0 %v857
    %1014 = vmatpush.bf16.msra.mxu0 %v849
    %1015 = vmatpush.bf16.msra.mxu0 %v841
    %1016 = vmatpush.bf16.msra.mxu0 %v833
    %1017 = vmatpush.bf16.msra.mxu0 %v825
    %1018 = vmatpush.bf16.msra.mxu0 %v817
    %1019 = vmatpush.bf16.msra.mxu0 %v809
    %1020 = vmatpush.bf16.msra.mxu0 %v801
    %1021 = vmatmul.bf16.gmra.mxu0 %v519
    %v1022 = vpop.f32.mrf.mxu0
    %v1023 = vadd.f32 %v593, %v1022
    %v1024 = vpop.f32.mrf.mxu0
    %1025 = vdwg.mxu0
    %v1026 = vmax.f32 %v932, 0.0
    %v1027 = vmax.f32 %v945, 0.0
    %v1028 = vmax.f32 %v958, 0.0
    %v1029 = vmax.f32 %v971, 0.0
    %v1030 = vmax.f32 %v984, 0.0
    %v1031 = vmax.f32 %v997, 0.0
    %v1032 = vmax.f32 %v1010, 0.0
    %v1033 = vmax.f32 %v1023, 0.0
    %v1034 = vpack.c.bf16 %v1026, %v1026
    %v1035 = vpack.c.bf16 %v1027, %v1027
    %v1036 = vpack.c.bf16 %v1028, %v1028
    %v1037 = vpack.c.bf16 %v1029, %v1029
    %v1038 = vpack.c.bf16 %v1030, %v1030
    %v1039 = vpack.c.bf16 %v1031, %v1031
    %v1040 = vpack.c.bf16 %v1032, %v1032
    %v1041 = vpack.c.bf16 %v1033, %v1033
    %v1042 = vld [vmem:[%s5] sm:$0xf]
    %v1043 = vld [vmem:[%s5 + $0x4] sm:$0xf]
    %v1044 = vld [vmem:[%s5 + $0x8] sm:$0xf]
    %v1045 = vld [vmem:[%s5 + $0xc] sm:$0xf]
    %v1046 = vld [vmem:[%s5 + $0x10] sm:$0xf]
    %v1047 = vld [vmem:[%s5 + $0x14] sm:$0xf]
    %v1048 = vld [vmem:[%s5 + $0x18] sm:$0xf]
    %v1049 = vld [vmem:[%s5 + $0x1c] sm:$0xf]
    %v1050 = vld [vmem:[%s5 + $0x20] sm:$0xf]
    %v1051 = vld [vmem:[%s5 + $0x24] sm:$0xf]
    %v1052 = vld [vmem:[%s5 + $0x28] sm:$0xf]
    %v1053 = vld [vmem:[%s5 + $0x2c] sm:$0xf]
    %v1054 = vld [vmem:[%s5 + $0x30] sm:$0xf]
    %v1055 = vld [vmem:[%s5 + $0x34] sm:$0xf]
    %v1056 = vld [vmem:[%s5 + $0x38] sm:$0xf]
    %v1057 = vld [vmem:[%s5 + $0x3c] sm:$0xf]
    %v1058 = vld [vmem:[%s5 + $0x40] sm:$0xf]
    %v1059 = vld [vmem:[%s5 + $0x44] sm:$0xf]
    %v1060 = vld [vmem:[%s5 + $0x48] sm:$0xf]
    %v1061 = vld [vmem:[%s5 + $0x4c] sm:$0xf]
    %v1062 = vld [vmem:[%s5 + $0x50] sm:$0xf]
    %v1063 = vld [vmem:[%s5 + $0x54] sm:$0xf]
    %v1064 = vld [vmem:[%s5 + $0x58] sm:$0xf]
    %v1065 = vld [vmem:[%s5 + $0x5c] sm:$0xf]
    %v1066 = vld [vmem:[%s5 + $0x60] sm:$0xf]
    %v1067 = vld [vmem:[%s5 + $0x64] sm:$0xf]
    %v1068 = vld [vmem:[%s5 + $0x68] sm:$0xf]
    %v1069 = vld [vmem:[%s5 + $0x6c] sm:$0xf]
    %v1070 = vld [vmem:[%s5 + $0x70] sm:$0xf]
    %v1071 = vld [vmem:[%s5 + $0x74] sm:$0xf]
    %v1072 = vld [vmem:[%s5 + $0x78] sm:$0xf]
    %v1073 = vld [vmem:[%s5 + $0x7c] sm:$0xf]
    %v1074 = vld [vmem:[%s5 + $0x80] sm:$0xf]
    %v1075 = vld [vmem:[%s5 + $0x84] sm:$0xf]
    %v1076 = vld [vmem:[%s5 + $0x88] sm:$0xf]
    %v1077 = vld [vmem:[%s5 + $0x8c] sm:$0xf]
    %v1078 = vld [vmem:[%s5 + $0x90] sm:$0xf]
    %v1079 = vld [vmem:[%s5 + $0x94] sm:$0xf]
    %v1080 = vld [vmem:[%s5 + $0x98] sm:$0xf]
    %v1081 = vld [vmem:[%s5 + $0x9c] sm:$0xf]
    %v1082 = vld [vmem:[%s5 + $0xa0] sm:$0xf]
    %v1083 = vld [vmem:[%s5 + $0xa4] sm:$0xf]
    %v1084 = vld [vmem:[%s5 + $0xa8] sm:$0xf]
    %v1085 = vld [vmem:[%s5 + $0xac] sm:$0xf]
    %v1086 = vld [vmem:[%s5 + $0xb0] sm:$0xf]
    %v1087 = vld [vmem:[%s5 + $0xb4] sm:$0xf]
    %v1088 = vld [vmem:[%s5 + $0xb8] sm:$0xf]
    %v1089 = vld [vmem:[%s5 + $0xbc] sm:$0xf]
    %v1090 = vld [vmem:[%s5 + $0xc0] sm:$0xf]
    %v1091 = vld [vmem:[%s5 + $0xc4] sm:$0xf]
    %v1092 = vld [vmem:[%s5 + $0xc8] sm:$0xf]
    %v1093 = vld [vmem:[%s5 + $0xcc] sm:$0xf]
    %v1094 = vld [vmem:[%s5 + $0xd0] sm:$0xf]
    %v1095 = vld [vmem:[%s5 + $0xd4] sm:$0xf]
    %v1096 = vld [vmem:[%s5 + $0xd8] sm:$0xf]
    %v1097 = vld [vmem:[%s5 + $0xdc] sm:$0xf]
    %v1098 = vld [vmem:[%s5 + $0xe0] sm:$0xf]
    %v1099 = vld [vmem:[%s5 + $0xe4] sm:$0xf]
    %v1100 = vld [vmem:[%s5 + $0xe8] sm:$0xf]
    %v1101 = vld [vmem:[%s5 + $0xec] sm:$0xf]
    %v1102 = vld [vmem:[%s5 + $0xf0] sm:$0xf]
    %v1103 = vld [vmem:[%s5 + $0xf4] sm:$0xf]
    %v1104 = vld [vmem:[%s5 + $0xf8] sm:$0xf]
    %v1105 = vld [vmem:[%s5 + $0xfc] sm:$0xf]
    %v1106 = vld [vmem:[%s5 + $0x100] sm:$0xf]
    %v1107 = vld [vmem:[%s5 + $0x104] sm:$0xf]
    %v1108 = vld [vmem:[%s5 + $0x108] sm:$0xf]
    %v1109 = vld [vmem:[%s5 + $0x10c] sm:$0xf]
    %v1110 = vld [vmem:[%s5 + $0x110] sm:$0xf]
    %v1111 = vld [vmem:[%s5 + $0x114] sm:$0xf]
    %v1112 = vld [vmem:[%s5 + $0x118] sm:$0xf]
    %v1113 = vld [vmem:[%s5 + $0x11c] sm:$0xf]
    %v1114 = vld [vmem:[%s5 + $0x120] sm:$0xf]
    %v1115 = vld [vmem:[%s5 + $0x124] sm:$0xf]
    %v1116 = vld [vmem:[%s5 + $0x128] sm:$0xf]
    %v1117 = vld [vmem:[%s5 + $0x12c] sm:$0xf]
    %v1118 = vld [vmem:[%s5 + $0x130] sm:$0xf]
    %v1119 = vld [vmem:[%s5 + $0x134] sm:$0xf]
    %v1120 = vld [vmem:[%s5 + $0x138] sm:$0xf]
    %v1121 = vld [vmem:[%s5 + $0x13c] sm:$0xf]
    %v1122 = vld [vmem:[%s5 + $0x140] sm:$0xf]
    %v1123 = vld [vmem:[%s5 + $0x144] sm:$0xf]
    %v1124 = vld [vmem:[%s5 + $0x148] sm:$0xf]
    %v1125 = vld [vmem:[%s5 + $0x14c] sm:$0xf]
    %v1126 = vld [vmem:[%s5 + $0x150] sm:$0xf]
    %v1127 = vld [vmem:[%s5 + $0x154] sm:$0xf]
    %v1128 = vld [vmem:[%s5 + $0x158] sm:$0xf]
    %v1129 = vld [vmem:[%s5 + $0x15c] sm:$0xf]
    %v1130 = vld [vmem:[%s5 + $0x160] sm:$0xf]
    %v1131 = vld [vmem:[%s5 + $0x164] sm:$0xf]
    %v1132 = vld [vmem:[%s5 + $0x168] sm:$0xf]
    %v1133 = vld [vmem:[%s5 + $0x16c] sm:$0xf]
    %v1134 = vld [vmem:[%s5 + $0x170] sm:$0xf]
    %v1135 = vld [vmem:[%s5 + $0x174] sm:$0xf]
    %v1136 = vld [vmem:[%s5 + $0x178] sm:$0xf]
    %v1137 = vld [vmem:[%s5 + $0x17c] sm:$0xf]
    %v1138 = vld [vmem:[%s5 + $0x180] sm:$0xf]
    %v1139 = vld [vmem:[%s5 + $0x184] sm:$0xf]
    %v1140 = vld [vmem:[%s5 + $0x188] sm:$0xf]
    %v1141 = vld [vmem:[%s5 + $0x18c] sm:$0xf]
    %v1142 = vld [vmem:[%s5 + $0x190] sm:$0xf]
    %v1143 = vld [vmem:[%s5 + $0x194] sm:$0xf]
    %v1144 = vld [vmem:[%s5 + $0x198] sm:$0xf]
    %v1145 = vld [vmem:[%s5 + $0x19c] sm:$0xf]
    %v1146 = vld [vmem:[%s5 + $0x1a0] sm:$0xf]
    %v1147 = vld [vmem:[%s5 + $0x1a4] sm:$0xf]
    %v1148 = vld [vmem:[%s5 + $0x1a8] sm:$0xf]
    %v1149 = vld [vmem:[%s5 + $0x1ac] sm:$0xf]
    %v1150 = vld [vmem:[%s5 + $0x1b0] sm:$0xf]
    %v1151 = vld [vmem:[%s5 + $0x1b4] sm:$0xf]
    %v1152 = vld [vmem:[%s5 + $0x1b8] sm:$0xf]
    %v1153 = vld [vmem:[%s5 + $0x1bc] sm:$0xf]
    %v1154 = vld [vmem:[%s5 + $0x1c0] sm:$0xf]
    %v1155 = vld [vmem:[%s5 + $0x1c4] sm:$0xf]
    %v1156 = vld [vmem:[%s5 + $0x1c8] sm:$0xf]
    %v1157 = vld [vmem:[%s5 + $0x1cc] sm:$0xf]
    %v1158 = vld [vmem:[%s5 + $0x1d0] sm:$0xf]
    %v1159 = vld [vmem:[%s5 + $0x1d4] sm:$0xf]
    %v1160 = vld [vmem:[%s5 + $0x1d8] sm:$0xf]
    %v1161 = vld [vmem:[%s5 + $0x1dc] sm:$0xf]
    %v1162 = vld [vmem:[%s5 + $0x1e0] sm:$0xf]
    %v1163 = vld [vmem:[%s5 + $0x1e4] sm:$0xf]
    %v1164 = vld [vmem:[%s5 + $0x1e8] sm:$0xf]
    %v1165 = vld [vmem:[%s5 + $0x1ec] sm:$0xf]
    %v1166 = vld [vmem:[%s5 + $0x1f0] sm:$0xf]
    %v1167 = vld [vmem:[%s5 + $0x1f4] sm:$0xf]
    %v1168 = vld [vmem:[%s5 + $0x1f8] sm:$0xf]
    %v1169 = vld [vmem:[%s5 + $0x1fc] sm:$0xf]
    %v1170 = vld [vmem:[%s6] sm:$0x1]
    %v1172 = vperm.slane %v1170, 0
    %v1302 = vunpack.c.l.b16 %v1042
    %v1303 = vunpack.c.l.b16 %v1043
    %v1304 = vunpack.c.l.b16 %v1044
    %v1305 = vunpack.c.l.b16 %v1045
    %v1306 = vunpack.c.l.b16 %v1046
    %v1307 = vunpack.c.l.b16 %v1047
    %v1308 = vunpack.c.l.b16 %v1048
    %v1309 = vunpack.c.l.b16 %v1049
    %v1310 = vunpack.c.l.b16 %v1050
    %v1311 = vunpack.c.l.b16 %v1051
    %v1312 = vunpack.c.l.b16 %v1052
    %v1313 = vunpack.c.l.b16 %v1053
    %v1314 = vunpack.c.l.b16 %v1054
    %v1315 = vunpack.c.l.b16 %v1055
    %v1316 = vunpack.c.l.b16 %v1056
    %v1317 = vunpack.c.l.b16 %v1057
    %v1318 = vunpack.c.l.b16 %v1058
    %v1319 = vunpack.c.l.b16 %v1059
    %v1320 = vunpack.c.l.b16 %v1060
    %v1321 = vunpack.c.l.b16 %v1061
    %v1322 = vunpack.c.l.b16 %v1062
    %v1323 = vunpack.c.l.b16 %v1063
    %v1324 = vunpack.c.l.b16 %v1064
    %v1325 = vunpack.c.l.b16 %v1065
    %v1326 = vunpack.c.l.b16 %v1066
    %v1327 = vunpack.c.l.b16 %v1067
    %v1328 = vunpack.c.l.b16 %v1068
    %v1329 = vunpack.c.l.b16 %v1069
    %v1330 = vunpack.c.l.b16 %v1070
    %v1331 = vunpack.c.l.b16 %v1071
    %v1332 = vunpack.c.l.b16 %v1072
    %v1333 = vunpack.c.l.b16 %v1073
    %v1334 = vunpack.c.l.b16 %v1074
    %v1335 = vunpack.c.l.b16 %v1075
    %v1336 = vunpack.c.l.b16 %v1076
    %v1337 = vunpack.c.l.b16 %v1077
    %v1338 = vunpack.c.l.b16 %v1078
    %v1339 = vunpack.c.l.b16 %v1079
    %v1340 = vunpack.c.l.b16 %v1080
    %v1341 = vunpack.c.l.b16 %v1081
    %v1342 = vunpack.c.l.b16 %v1082
    %v1343 = vunpack.c.l.b16 %v1083
    %v1344 = vunpack.c.l.b16 %v1084
    %v1345 = vunpack.c.l.b16 %v1085
    %v1346 = vunpack.c.l.b16 %v1086
    %v1347 = vunpack.c.l.b16 %v1087
    %v1348 = vunpack.c.l.b16 %v1088
    %v1349 = vunpack.c.l.b16 %v1089
    %v1350 = vunpack.c.l.b16 %v1090
    %v1351 = vunpack.c.l.b16 %v1091
    %v1352 = vunpack.c.l.b16 %v1092
    %v1353 = vunpack.c.l.b16 %v1093
    %v1354 = vunpack.c.l.b16 %v1094
    %v1355 = vunpack.c.l.b16 %v1095
    %v1356 = vunpack.c.l.b16 %v1096
    %v1357 = vunpack.c.l.b16 %v1097
    %v1358 = vunpack.c.l.b16 %v1098
    %v1359 = vunpack.c.l.b16 %v1099
    %v1360 = vunpack.c.l.b16 %v1100
    %v1361 = vunpack.c.l.b16 %v1101
    %v1362 = vunpack.c.l.b16 %v1102
    %v1363 = vunpack.c.l.b16 %v1103
    %v1364 = vunpack.c.l.b16 %v1104
    %v1365 = vunpack.c.l.b16 %v1105
    %v1366 = vunpack.c.l.b16 %v1106
    %v1367 = vunpack.c.l.b16 %v1107
    %v1368 = vunpack.c.l.b16 %v1108
    %v1369 = vunpack.c.l.b16 %v1109
    %v1370 = vunpack.c.l.b16 %v1110
    %v1371 = vunpack.c.l.b16 %v1111
    %v1372 = vunpack.c.l.b16 %v1112
    %v1373 = vunpack.c.l.b16 %v1113
    %v1374 = vunpack.c.l.b16 %v1114
    %v1375 = vunpack.c.l.b16 %v1115
    %v1376 = vunpack.c.l.b16 %v1116
    %v1377 = vunpack.c.l.b16 %v1117
    %v1378 = vunpack.c.l.b16 %v1118
    %v1379 = vunpack.c.l.b16 %v1119
    %v1380 = vunpack.c.l.b16 %v1120
    %v1381 = vunpack.c.l.b16 %v1121
    %v1382 = vunpack.c.l.b16 %v1122
    %v1383 = vunpack.c.l.b16 %v1123
    %v1384 = vunpack.c.l.b16 %v1124
    %v1385 = vunpack.c.l.b16 %v1125
    %v1386 = vunpack.c.l.b16 %v1126
    %v1387 = vunpack.c.l.b16 %v1127
    %v1388 = vunpack.c.l.b16 %v1128
    %v1389 = vunpack.c.l.b16 %v1129
    %v1390 = vunpack.c.l.b16 %v1130
    %v1391 = vunpack.c.l.b16 %v1131
    %v1392 = vunpack.c.l.b16 %v1132
    %v1393 = vunpack.c.l.b16 %v1133
    %v1394 = vunpack.c.l.b16 %v1134
    %v1395 = vunpack.c.l.b16 %v1135
    %v1396 = vunpack.c.l.b16 %v1136
    %v1397 = vunpack.c.l.b16 %v1137
    %v1398 = vunpack.c.l.b16 %v1138
    %v1399 = vunpack.c.l.b16 %v1139
    %v1400 = vunpack.c.l.b16 %v1140
    %v1401 = vunpack.c.l.b16 %v1141
    %v1402 = vunpack.c.l.b16 %v1142
    %v1403 = vunpack.c.l.b16 %v1143
    %v1404 = vunpack.c.l.b16 %v1144
    %v1405 = vunpack.c.l.b16 %v1145
    %v1406 = vunpack.c.l.b16 %v1146
    %v1407 = vunpack.c.l.b16 %v1147
    %v1408 = vunpack.c.l.b16 %v1148
    %v1409 = vunpack.c.l.b16 %v1149
    %v1410 = vunpack.c.l.b16 %v1150
    %v1411 = vunpack.c.l.b16 %v1151
    %v1412 = vunpack.c.l.b16 %v1152
    %v1413 = vunpack.c.l.b16 %v1153
    %v1414 = vunpack.c.l.b16 %v1154
    %v1415 = vunpack.c.l.b16 %v1155
    %v1416 = vunpack.c.l.b16 %v1156
    %v1417 = vunpack.c.l.b16 %v1157
    %v1418 = vunpack.c.l.b16 %v1158
    %v1419 = vunpack.c.l.b16 %v1159
    %v1420 = vunpack.c.l.b16 %v1160
    %v1421 = vunpack.c.l.b16 %v1161
    %v1422 = vunpack.c.l.b16 %v1162
    %v1423 = vunpack.c.l.b16 %v1163
    %v1424 = vunpack.c.l.b16 %v1164
    %v1425 = vunpack.c.l.b16 %v1165
    %v1426 = vunpack.c.l.b16 %v1166
    %v1427 = vunpack.c.l.b16 %v1167
    %v1428 = vunpack.c.l.b16 %v1168
    %v1429 = vunpack.c.l.b16 %v1169
    %v1430 = vpack.c.b16 %v1303, %v1302
    %v1431 = vpack.c.b16 %v1305, %v1304
    %v1432 = vpack.c.b16 %v1307, %v1306
    %v1433 = vpack.c.b16 %v1309, %v1308
    %v1434 = vpack.c.b16 %v1311, %v1310
    %v1435 = vpack.c.b16 %v1313, %v1312
    %v1436 = vpack.c.b16 %v1315, %v1314
    %v1437 = vpack.c.b16 %v1317, %v1316
    %v1438 = vpack.c.b16 %v1319, %v1318
    %v1439 = vpack.c.b16 %v1321, %v1320
    %v1440 = vpack.c.b16 %v1323, %v1322
    %v1441 = vpack.c.b16 %v1325, %v1324
    %v1442 = vpack.c.b16 %v1327, %v1326
    %v1443 = vpack.c.b16 %v1329, %v1328
    %v1444 = vpack.c.b16 %v1331, %v1330
    %v1445 = vpack.c.b16 %v1333, %v1332
    %v1446 = vpack.c.b16 %v1335, %v1334
    %v1447 = vpack.c.b16 %v1337, %v1336
    %v1448 = vpack.c.b16 %v1339, %v1338
    %v1449 = vpack.c.b16 %v1341, %v1340
    %v1450 = vpack.c.b16 %v1343, %v1342
    %v1451 = vpack.c.b16 %v1345, %v1344
    %v1452 = vpack.c.b16 %v1347, %v1346
    %v1453 = vpack.c.b16 %v1349, %v1348
    %v1454 = vpack.c.b16 %v1351, %v1350
    %v1455 = vpack.c.b16 %v1353, %v1352
    %v1456 = vpack.c.b16 %v1355, %v1354
    %v1457 = vpack.c.b16 %v1357, %v1356
    %v1458 = vpack.c.b16 %v1359, %v1358
    %v1459 = vpack.c.b16 %v1361, %v1360
    %v1460 = vpack.c.b16 %v1363, %v1362
    %v1461 = vpack.c.b16 %v1365, %v1364
    %v1462 = vpack.c.b16 %v1367, %v1366
    %v1463 = vpack.c.b16 %v1369, %v1368
    %v1464 = vpack.c.b16 %v1371, %v1370
    %v1465 = vpack.c.b16 %v1373, %v1372
    %v1466 = vpack.c.b16 %v1375, %v1374
    %v1467 = vpack.c.b16 %v1377, %v1376
    %v1468 = vpack.c.b16 %v1379, %v1378
    %v1469 = vpack.c.b16 %v1381, %v1380
    %v1470 = vpack.c.b16 %v1383, %v1382
    %v1471 = vpack.c.b16 %v1385, %v1384
    %v1472 = vpack.c.b16 %v1387, %v1386
    %v1473 = vpack.c.b16 %v1389, %v1388
    %v1474 = vpack.c.b16 %v1391, %v1390
    %v1475 = vpack.c.b16 %v1393, %v1392
    %v1476 = vpack.c.b16 %v1395, %v1394
    %v1477 = vpack.c.b16 %v1397, %v1396
    %v1478 = vpack.c.b16 %v1399, %v1398
    %v1479 = vpack.c.b16 %v1401, %v1400
    %v1480 = vpack.c.b16 %v1403, %v1402
    %v1481 = vpack.c.b16 %v1405, %v1404
    %v1482 = vpack.c.b16 %v1407, %v1406
    %v1483 = vpack.c.b16 %v1409, %v1408
    %v1484 = vpack.c.b16 %v1411, %v1410
    %v1485 = vpack.c.b16 %v1413, %v1412
    %v1486 = vpack.c.b16 %v1415, %v1414
    %v1487 = vpack.c.b16 %v1417, %v1416
    %v1488 = vpack.c.b16 %v1419, %v1418
    %v1489 = vpack.c.b16 %v1421, %v1420
    %v1490 = vpack.c.b16 %v1423, %v1422
    %v1491 = vpack.c.b16 %v1425, %v1424
    %v1492 = vpack.c.b16 %v1427, %v1426
    %v1493 = vpack.c.b16 %v1429, %v1428
    %1558 = vmatpush.bf16.msra.mxu0 %v1437
    %1559 = vmatpush.bf16.msra.mxu0 %v1436
    %1560 = vmatpush.bf16.msra.mxu0 %v1435
    %1561 = vmatpush.bf16.msra.mxu0 %v1434
    %1562 = vmatpush.bf16.msra.mxu0 %v1433
    %1563 = vmatpush.bf16.msra.mxu0 %v1432
    %1564 = vmatpush.bf16.msra.mxu0 %v1431
    %1565 = vmatpush.bf16.msra.mxu0 %v1430
    %1566 = vmatmul.bf16.gmra.mxu0 %v1034
    %v1567 = vpop.f32.mrf.mxu0
    %v1568 = vadd.f32 %v1172, %v1567
    %v1569 = vpop.f32.mrf.mxu0
    %1570 = vdwg.mxu0
    %1571 = vmatpush.bf16.msra.mxu0 %v1445
    %1572 = vmatpush.bf16.msra.mxu0 %v1444
    %1573 = vmatpush.bf16.msra.mxu0 %v1443
    %1574 = vmatpush.bf16.msra.mxu0 %v1442
    %1575 = vmatpush.bf16.msra.mxu0 %v1441
    %1576 = vmatpush.bf16.msra.mxu0 %v1440
    %1577 = vmatpush.bf16.msra.mxu0 %v1439
    %1578 = vmatpush.bf16.msra.mxu0 %v1438
    %1579 = vmatmul.bf16.gmra.mxu0 %v1035
    %v1580 = vpop.f32.mrf.mxu0
    %v1581 = vadd.f32 %v1568, %v1580
    %v1582 = vpop.f32.mrf.mxu0
    %1583 = vdwg.mxu0
    %1584 = vmatpush.bf16.msra.mxu0 %v1453
    %1585 = vmatpush.bf16.msra.mxu0 %v1452
    %1586 = vmatpush.bf16.msra.mxu0 %v1451
    %1587 = vmatpush.bf16.msra.mxu0 %v1450
    %1588 = vmatpush.bf16.msra.mxu0 %v1449
    %1589 = vmatpush.bf16.msra.mxu0 %v1448
    %1590 = vmatpush.bf16.msra.mxu0 %v1447
    %1591 = vmatpush.bf16.msra.mxu0 %v1446
    %1592 = vmatmul.bf16.gmra.mxu0 %v1036
    %v1593 = vpop.f32.mrf.mxu0
    %v1594 = vadd.f32 %v1581, %v1593
    %v1595 = vpop.f32.mrf.mxu0
    %1596 = vdwg.mxu0
    %1597 = vmatpush.bf16.msra.mxu0 %v1461
    %1598 = vmatpush.bf16.msra.mxu0 %v1460
    %1599 = vmatpush.bf16.msra.mxu0 %v1459
    %1600 = vmatpush.bf16.msra.mxu0 %v1458
    %1601 = vmatpush.bf16.msra.mxu0 %v1457
    %1602 = vmatpush.bf16.msra.mxu0 %v1456
    %1603 = vmatpush.bf16.msra.mxu0 %v1455
    %1604 = vmatpush.bf16.msra.mxu0 %v1454
    %1605 = vmatmul.bf16.gmra.mxu0 %v1037
    %v1606 = vpop.f32.mrf.mxu0
    %v1607 = vadd.f32 %v1594, %v1606
    %v1608 = vpop.f32.mrf.mxu0
    %1609 = vdwg.mxu0
    %1610 = vmatpush.bf16.msra.mxu0 %v1469
    %1611 = vmatpush.bf16.msra.mxu0 %v1468
    %1612 = vmatpush.bf16.msra.mxu0 %v1467
    %1613 = vmatpush.bf16.msra.mxu0 %v1466
    %1614 = vmatpush.bf16.msra.mxu0 %v1465
    %1615 = vmatpush.bf16.msra.mxu0 %v1464
    %1616 = vmatpush.bf16.msra.mxu0 %v1463
    %1617 = vmatpush.bf16.msra.mxu0 %v1462
    %1618 = vmatmul.bf16.gmra.mxu0 %v1038
    %v1619 = vpop.f32.mrf.mxu0
    %v1620 = vadd.f32 %v1607, %v1619
    %v1621 = vpop.f32.mrf.mxu0
    %1622 = vdwg.mxu0
    %1623 = vmatpush.bf16.msra.mxu0 %v1477
    %1624 = vmatpush.bf16.msra.mxu0 %v1476
    %1625 = vmatpush.bf16.msra.mxu0 %v1475
    %1626 = vmatpush.bf16.msra.mxu0 %v1474
    %1627 = vmatpush.bf16.msra.mxu0 %v1473
    %1628 = vmatpush.bf16.msra.mxu0 %v1472
    %1629 = vmatpush.bf16.msra.mxu0 %v1471
    %1630 = vmatpush.bf16.msra.mxu0 %v1470
    %1631 = vmatmul.bf16.gmra.mxu0 %v1039
    %v1632 = vpop.f32.mrf.mxu0
    %v1633 = vadd.f32 %v1620, %v1632
    %v1634 = vpop.f32.mrf.mxu0
    %1635 = vdwg.mxu0
    %1636 = vmatpush.bf16.msra.mxu0 %v1485
    %1637 = vmatpush.bf16.msra.mxu0 %v1484
    %1638 = vmatpush.bf16.msra.mxu0 %v1483
    %1639 = vmatpush.bf16.msra.mxu0 %v1482
    %1640 = vmatpush.bf16.msra.mxu0 %v1481
    %1641 = vmatpush.bf16.msra.mxu0 %v1480
    %1642 = vmatpush.bf16.msra.mxu0 %v1479
    %1643 = vmatpush.bf16.msra.mxu0 %v1478
    %1644 = vmatmul.bf16.gmra.mxu0 %v1040
    %v1645 = vpop.f32.mrf.mxu0
    %v1646 = vadd.f32 %v1633, %v1645
    %v1647 = vpop.f32.mrf.mxu0
    %1648 = vdwg.mxu0
    %1649 = vmatpush.bf16.msra.mxu0 %v1493
    %1650 = vmatpush.bf16.msra.mxu0 %v1492
    %1651 = vmatpush.bf16.msra.mxu0 %v1491
    %1652 = vmatpush.bf16.msra.mxu0 %v1490
    %1653 = vmatpush.bf16.msra.mxu0 %v1489
    %1654 = vmatpush.bf16.msra.mxu0 %v1488
    %1655 = vmatpush.bf16.msra.mxu0 %v1487
    %1656 = vmatpush.bf16.msra.mxu0 %v1486
    %1657 = vmatmul.bf16.gmra.mxu0 %v1041
    %v1658 = vpop.f32.mrf.mxu0
    %v1659 = vadd.f32 %v1646, %v1658
    %v1660 = vpop.f32.mrf.mxu0
    %1661 = vdwg.mxu0
    %1662 = vmax.xlane.f32.xlu0 %v1659
    %v1663 = vpop.xlane.xlu0 %1662
    %v1664 = vsub.f32 %v1659, %v1663
    %v1665 = vmul.f32 %v1664, 1.442695
    %v1666 = vpow.pop %v1665
    %1667 = vadd.xlane.f32.xlu0 %v1666
    %v1668 = vpop.xlane.xlu0 %1667
    %v1669 = vlog2.pop %v1668
    %v1670 = vmul.f32 %v1669, 0.6931472
    %v1671 = vsub.f32 %v1664, %v1670
    %1672 = vst [vmem:[%s7] sm:$0xff] %v1671
  $region37: #{keyword_cnn_forward.1} parent=0 // pred_fallthru
    _
  // Predicated region
  $region38: #{keyword_cnn_forward.1} parent=0 // pred_check
    _
  $region39: #{keyword_cnn_forward.1} parent=0 // pred_check_branch
    %1674 = sbr.rel (0) target = $region41
  $region40: #{keyword_cnn_forward.1} parent=0 // pred_region
    _
  $region41: #{keyword_cnn_forward.1} parent=0 // pred_fallthru
    _
  // Predicated region
  $region42: #{keyword_cnn_forward.1} parent=0 // pred_check
    _
  $region43: #{keyword_cnn_forward.1} parent=0 // pred_check_branch
    %1676 = sbr.rel (0) target = $region45
  $region44: #{keyword_cnn_forward.1} parent=0 // pred_region
    _
  $region45: #{keyword_cnn_forward.1} parent=0 // pred_fallthru
    _

</llo_original>
